<compile_context>
chip_gen: v7x
topology: tpu7x:2x2x1
jax: 0.10.0
libtpu: 0.0.40
codegen_flags: <defaults>
</compile_context>

<pallas_src>
import functools

import jax
import jax.numpy as jnp
from jax import lax
from jax.experimental import pallas as pl
from jax.experimental.pallas import tpu as pltpu


def _pfconv_kernel(x_ref, w_ref, b_ref, o_ref, xs_ref, *, K, pad, Ci):
    # x_ref : (NB, H, W, C)      NHWC input block, C = 64*Ci lanes
    # w_ref : (K*K, Ci, C)       compact per-tap weights: w[t, ci, g*Co+co]
    # b_ref : (1, C)
    # o_ref : (NB, Ho, Wo, C)
    # xs_ref: (K*NB, Hp, Wo, C)  f32 scratch: the K zero-padded W-shifted slabs
    NB, H, W, C = x_ref.shape
    _, Ho, Wo, _ = o_ref.shape
    M = NB * Ho * Wo

    x = x_ref[...].astype(jnp.float32)

    # ---- hoisted kw shifts: build the K zero-padded W-shifted slabs once ----
    # xs[kw*NB + b, h, wo, :] = x_padded[b, h, wo + kw, :]
    xs_ref[...] = jnp.zeros_like(xs_ref)
    for kw in range(K):
        lo = max(0, pad - kw)
        hi = min(Wo, W + pad - kw)
        if hi > lo:
            xs_ref[kw * NB:(kw + 1) * NB, pad:pad + H, lo:hi, :] = (
                x[:, :, lo + kw - pad:hi + kw - pad, :])

    # Lane residue within a group (built once, reused by all taps).
    lane_res = lax.broadcasted_iota(jnp.int32, (M, C), 1) % Ci

    # ---- bias + 9 taps x Ci lane-aligned FMAs (pure VPU/XLU, exact f32) ----
    acc = jnp.broadcast_to(b_ref[...].astype(jnp.float32), (M, C))
    for kh in range(K):
        for kw in range(K):
            # Tile-aligned H slice of the pre-shifted slab; reshape is
            # layout-preserving ((Wo, C) minor tile unchanged).
            p = xs_ref[kw * NB:(kw + 1) * NB, kh:kh + Ho, :, :].reshape(M, C)
            w_t = w_ref[kh * K + kw].astype(jnp.float32)        # (Ci, C)
            for ci in range(Ci):
                # a_ci[:, l] = p[:, (l // Ci) * Ci + ci]  (same-group input ci)
                a_ci = p
                for r in range(Ci):
                    if r != ci:
                        a_ci = jnp.where(
                            lane_res == r,
                            pltpu.roll(p, (r - ci) % C, axis=1),
                            a_ci)
                acc = acc + a_ci * w_t[ci:ci + 1, :]

    o_ref[...] = acc.reshape(NB, Ho, Wo, C).astype(o_ref.dtype)


def per_frequency_convolution(x, weight, bias, *, groups=64, kernel_size=3,
                              padding=1):
    """x: (N, groups*Ci, H, W) NCHW; weight: (groups*Co, Ci, K, K); bias: (groups*Co,)."""
    N, Cin, H, W = x.shape
    G = groups
    Ci = Cin // G
    Cout = weight.shape[0]
    Co = Cout // G
    K = kernel_size
    if Ci * G != Cin or Co * G != Cout:
        raise ValueError("channel counts must be multiples of `groups`")
    if Ci != Co:
        # TODO(synk): Ci != Co needs the block-diagonal MXU formulation
        # (different in/out lane widths); not needed for this module's use.
        raise NotImplementedError("per-group in/out channel counts must match")
    Ho = H + 2 * padding - K + 1
    Wo = W + 2 * padding - K + 1
    Hp = H + 2 * padding

    # ---- minimal layout glue (plain JAX) ----
    # NCHW -> NHWC: PyTorch channel index g*Ci+ci becomes the lane index.
    x_nhwc = x.transpose(0, 2, 3, 1)                          # (N, H, W, Cin)
    # Compact per-tap weights: w_c[kh*K+kw, ci, g*Co+co] = weight[g*Co+co, ci, kh, kw]
    w_c = jnp.transpose(weight, (2, 3, 1, 0)).reshape(K * K, Ci, Cout)
    b_r = bias.reshape(1, Cout)

    kernel = functools.partial(_pfconv_kernel, K=K, pad=padding, Ci=Ci)

    out = pl.pallas_call(
        kernel,
        out_shape=jax.ShapeDtypeStruct((N, Ho, Wo, Cout), x.dtype),
        grid_spec=pltpu.PrefetchScalarGridSpec(
            num_scalar_prefetch=0,
            # Batch is folded into the kernel's row dimension -> single grid
            # step (no per-step overhead on single-TC v5e/v6e).  On v7x with
            # larger N, grid over batch with "parallel" semantics instead.
            grid=(1,),
            in_specs=[
                pl.BlockSpec((N, H, W, Cin), lambda i: (0, 0, 0, 0)),
                pl.BlockSpec((K * K, Ci, Cout), lambda i: (0, 0, 0)),
                pl.BlockSpec((1, Cout), lambda i: (0, 0)),
            ],
            out_specs=pl.BlockSpec((N, Ho, Wo, Cout), lambda i: (0, 0, 0, 0)),
            scratch_shapes=[pltpu.VMEM((K * N, Hp, Wo, Cin), jnp.float32)],
        ),
        compiler_params=pltpu.CompilerParams(
            dimension_semantics=("arbitrary",)),
    )(x_nhwc, w_c, b_r)

    # NHWC -> NCHW; lane index is already the PyTorch out-channel index g*Co+co.
    return out.transpose(0, 3, 1, 2)


if __name__ == "__main__":
    # Module config: in_channels=2, out_channels=2 -> 128 total in/out chans,
    # 64 groups, 3x3 kernel, padding=1, stride=1, bias=True.
    G = 64
    in_channels, out_channels = 2, 2
    K, PAD = 3, 1
    N, H, W = 2, 8, 8

    key = jax.random.PRNGKey(0)
    kx, kw, kb = jax.random.split(key, 3)
    x = jax.random.normal(kx, (N, in_channels * G, H, W), dtype=jnp.float32)
    # Conv2d weight: (out_channels*64, in_channels, K, K); bias: (out_channels*64,)
    weight = 0.1 * jax.random.normal(kw, (out_channels * G, in_channels, K, K),
                                     dtype=jnp.float32)
    bias = 0.1 * jax.random.normal(kb, (out_channels * G,), dtype=jnp.float32)

    y = per_frequency_convolution(x, weight, bias, groups=G,
                                  kernel_size=K, padding=PAD)
    y = jax.block_until_ready(y)

    # Reference check against XLA grouped conv (same semantics as torch Conv2d).
    ref = lax.conv_general_dilated(
        x, weight, window_strides=(1, 1), padding=((PAD, PAD), (PAD, PAD)),
        dimension_numbers=("NCHW", "OIHW", "NCHW"),
        feature_group_count=G,
        precision=lax.Precision.HIGHEST) + bias[None, :, None, None]
    assert y.shape == (N, out_channels * G, H, W)
    assert jnp.allclose(y, ref, atol=1e-4, rtol=1e-4)

    print("KERNEL_OK")
</pallas_src>

<mosaic_0001>
module attributes {stable_mosaic.version = 11 : i64} {
  func.func @_pfconv_kernel(%arg0: i32, %arg1: memref<2x8x8x128xf32, #tpu.memory_space<vmem>>, %arg2: memref<9x2x128xf32, #tpu.memory_space<vmem>>, %arg3: memref<1x128xf32, #tpu.memory_space<vmem>>, %arg4: memref<2x8x8x128xf32, #tpu.memory_space<vmem>>, %arg5: memref<6x10x8x128xf32, #tpu.memory_space<vmem>>) attributes {dimension_semantics = [#tpu.dimension_semantics<arbitrary>], iteration_bounds = array<i64: 1>, scalar_prefetch = 0 : i64, scratch_operands = 1 : i64, tpu.core_type = #tpu.core_type<tc>, window_params = [{pipeline_mode = #tpu.pipeline_mode<synchronous>, transform_indices = @transform_0, window_bounds = array<i64: 2, 8, 8, 128>}, {pipeline_mode = #tpu.pipeline_mode<synchronous>, transform_indices = @transform_1, window_bounds = array<i64: 9, 2, 128>}, {pipeline_mode = #tpu.pipeline_mode<synchronous>, transform_indices = @transform_2, window_bounds = array<i64: 1, 128>}, {pipeline_mode = #tpu.pipeline_mode<synchronous>, transform_indices = @transform_3, window_bounds = array<i64: 2, 8, 8, 128>}]} {
    %c0 = arith.constant 0 : index
    %c0_0 = arith.constant 0 : index
    %c0_1 = arith.constant 0 : index
    %c0_2 = arith.constant 0 : index
    %0 = vector.load %arg1[%c0, %c0_0, %c0_1, %c0_2] : memref<2x8x8x128xf32, #tpu.memory_space<vmem>>, vector<2x8x8x128xf32>
    %cst = arith.constant 0.000000e+00 : f32
    %1 = vector.broadcast %cst : f32 to vector<6x10x8x128xf32>
    %c0_3 = arith.constant 0 : index
    %c0_4 = arith.constant 0 : index
    %c0_5 = arith.constant 0 : index
    %c0_6 = arith.constant 0 : index
    %2 = vector.load %arg5[%c0_3, %c0_4, %c0_5, %c0_6] : memref<6x10x8x128xf32, #tpu.memory_space<vmem>>, vector<6x10x8x128xf32>
    tpu.vector_store %arg5[%c0_3, %c0_4, %c0_5, %c0_6], %1 {strides = array<i32>} : memref<6x10x8x128xf32, #tpu.memory_space<vmem>>, vector<6x10x8x128xf32>,
    %3 = vector.extract_strided_slice %0 {offsets = [0, 0, 0, 0], sizes = [2, 8, 7, 128], strides = [1, 1, 1, 1]} : vector<2x8x8x128xf32> to vector<2x8x7x128xf32>
    %c0_7 = arith.constant 0 : index
    %c1 = arith.constant 1 : index
    %c1_8 = arith.constant 1 : index
    %c0_9 = arith.constant 0 : index
    %4 = vector.load %arg5[%c0_7, %c1, %c1_8, %c0_9] : memref<6x10x8x128xf32, #tpu.memory_space<vmem>>, vector<2x8x7x128xf32>
    tpu.vector_store %arg5[%c0_7, %c1, %c1_8, %c0_9], %3 {strides = array<i32>} : memref<6x10x8x128xf32, #tpu.memory_space<vmem>>, vector<2x8x7x128xf32>,
    %c2 = arith.constant 2 : index
    %c1_10 = arith.constant 1 : index
    %c0_11 = arith.constant 0 : index
    %c0_12 = arith.constant 0 : index
    %5 = vector.load %arg5[%c2, %c1_10, %c0_11, %c0_12] : memref<6x10x8x128xf32, #tpu.memory_space<vmem>>, vector<2x8x8x128xf32>
    tpu.vector_store %arg5[%c2, %c1_10, %c0_11, %c0_12], %0 {strides = array<i32>} : memref<6x10x8x128xf32, #tpu.memory_space<vmem>>, vector<2x8x8x128xf32>,
    %6 = vector.extract_strided_slice %0 {offsets = [0, 0, 1, 0], sizes = [2, 8, 7, 128], strides = [1, 1, 1, 1]} : vector<2x8x8x128xf32> to vector<2x8x7x128xf32>
    %c4 = arith.constant 4 : index
    %c1_13 = arith.constant 1 : index
    %c0_14 = arith.constant 0 : index
    %c0_15 = arith.constant 0 : index
    %7 = vector.load %arg5[%c4, %c1_13, %c0_14, %c0_15] : memref<6x10x8x128xf32, #tpu.memory_space<vmem>>, vector<2x8x7x128xf32>
    tpu.vector_store %arg5[%c4, %c1_13, %c0_14, %c0_15], %6 {strides = array<i32>} : memref<6x10x8x128xf32, #tpu.memory_space<vmem>>, vector<2x8x7x128xf32>,
    %8 = tpu.iota {dimensions = array<i32: 1>} : vector<128x128xi32>
    %c2_i32 = arith.constant 2 : i32
    %c0_i32 = arith.constant 0 : i32
    %9 = arith.cmpi eq, %c2_i32, %c0_i32 : i32
    %c1_i32 = arith.constant 1 : i32
    %10 = arith.select %9, %c1_i32, %c2_i32 : i32
    %11 = vector.broadcast %10 : i32 to vector<128x128xi32>
    %12 = arith.remsi %8, %11 : vector<128x128xi32>
    %c0_i32_16 = arith.constant 0 : i32
    %13 = vector.broadcast %c0_i32_16 : i32 to vector<128x128xi32>
    %14 = arith.cmpi ne, %12, %13 : vector<128x128xi32>
    %c0_i32_17 = arith.constant 0 : i32
    %15 = vector.broadcast %c0_i32_17 : i32 to vector<128x128xi32>
    %16 = arith.cmpi slt, %12, %15 : vector<128x128xi32>
    %c0_i32_18 = arith.constant 0 : i32
    %17 = arith.cmpi slt, %10, %c0_i32_18 : i32
    %18 = vector.broadcast %17 : i1 to vector<128x128xi1>
    %19 = vector.broadcast %18 : vector<128x128xi1> to vector<128x128xi1>
    %20 = arith.xori %16, %19 : vector<128x128xi1>
    %21 = arith.andi %20, %14 : vector<128x128xi1>
    %22 = vector.broadcast %10 : i32 to vector<128x128xi32>
    %23 = arith.addi %12, %22 : vector<128x128xi32>
    %24 = arith.select %21, %23, %12 : vector<128x128xi1>, vector<128x128xi32>
    %c0_19 = arith.constant 0 : index
    %c0_20 = arith.constant 0 : index
    %25 = vector.load %arg3[%c0_19, %c0_20] : memref<1x128xf32, #tpu.memory_space<vmem>>, vector<1x128xf32>
    %26 = vector.shape_cast %25 : vector<1x128xf32> to vector<1x128xf32>
    %27 = vector.broadcast %26 : vector<1x128xf32> to vector<128x128xf32>
    %c0_21 = arith.constant 0 : index
    %c0_22 = arith.constant 0 : index
    %c0_23 = arith.constant 0 : index
    %c0_24 = arith.constant 0 : index
    %28 = vector.load %arg5[%c0_21, %c0_22, %c0_23, %c0_24] : memref<6x10x8x128xf32, #tpu.memory_space<vmem>>, vector<2x8x8x128xf32>
    %29 = vector.shape_cast %28 : vector<2x8x8x128xf32> to vector<128x128xf32>
    %c0_25 = arith.constant 0 : index
    %c0_26 = arith.constant 0 : index
    %c0_27 = arith.constant 0 : index
    %30 = vector.load %arg2[%c0_25, %c0_26, %c0_27] : memref<9x2x128xf32, #tpu.memory_space<vmem>>, vector<1x2x128xf32>
    %31 = vector.shape_cast %30 : vector<1x2x128xf32> to vector<2x128xf32>
    %c1_i32_28 = arith.constant 1 : i32
    %32 = vector.broadcast %c1_i32_28 : i32 to vector<128x128xi32>
    %33 = arith.cmpi eq, %24, %32 : vector<128x128xi32>
    %c1_i32_29 = arith.constant 1 : i32
    %34 = tpu.dynamic_rotate %29 by %c1_i32_29 dim 1 : vector<128x128xf32>, i32 -> vector<128x128xf32>
    %35 = arith.select %33, %34, %29 : vector<128x128xi1>, vector<128x128xf32>
    %36 = vector.extract_strided_slice %31 {offsets = [0, 0], sizes = [1, 128], strides = [1, 1]} : vector<2x128xf32> to vector<1x128xf32>
    %37 = vector.broadcast %36 : vector<1x128xf32> to vector<128x128xf32>
    %38 = arith.mulf %35, %37 : vector<128x128xf32>
    %39 = arith.addf %27, %38 : vector<128x128xf32>
    %c0_i32_30 = arith.constant 0 : i32
    %40 = vector.broadcast %c0_i32_30 : i32 to vector<128x128xi32>
    %41 = arith.cmpi eq, %24, %40 : vector<128x128xi32>
    %c127_i32 = arith.constant 127 : i32
    %42 = tpu.dynamic_rotate %29 by %c127_i32 dim 1 : vector<128x128xf32>, i32 -> vector<128x128xf32>
    %43 = arith.select %41, %42, %29 : vector<128x128xi1>, vector<128x128xf32>
    %44 = vector.extract_strided_slice %31 {offsets = [1, 0], sizes = [1, 128], strides = [1, 1]} : vector<2x128xf32> to vector<1x128xf32>
    %45 = vector.broadcast %44 : vector<1x128xf32> to vector<128x128xf32>
    %46 = arith.mulf %43, %45 : vector<128x128xf32>
    %47 = arith.addf %39, %46 : vector<128x128xf32>
    %c2_31 = arith.constant 2 : index
    %c0_32 = arith.constant 0 : index
    %c0_33 = arith.constant 0 : index
    %c0_34 = arith.constant 0 : index
    %48 = vector.load %arg5[%c2_31, %c0_32, %c0_33, %c0_34] : memref<6x10x8x128xf32, #tpu.memory_space<vmem>>, vector<2x8x8x128xf32>
    %49 = vector.shape_cast %48 : vector<2x8x8x128xf32> to vector<128x128xf32>
    %c1_35 = arith.constant 1 : index
    %c0_36 = arith.constant 0 : index
    %c0_37 = arith.constant 0 : index
    %50 = vector.load %arg2[%c1_35, %c0_36, %c0_37] : memref<9x2x128xf32, #tpu.memory_space<vmem>>, vector<1x2x128xf32>
    %51 = vector.shape_cast %50 : vector<1x2x128xf32> to vector<2x128xf32>
    %c1_i32_38 = arith.constant 1 : i32
    %52 = vector.broadcast %c1_i32_38 : i32 to vector<128x128xi32>
    %53 = arith.cmpi eq, %24, %52 : vector<128x128xi32>
    %c1_i32_39 = arith.constant 1 : i32
    %54 = tpu.dynamic_rotate %49 by %c1_i32_39 dim 1 : vector<128x128xf32>, i32 -> vector<128x128xf32>
    %55 = arith.select %53, %54, %49 : vector<128x128xi1>, vector<128x128xf32>
    %56 = vector.extract_strided_slice %51 {offsets = [0, 0], sizes = [1, 128], strides = [1, 1]} : vector<2x128xf32> to vector<1x128xf32>
    %57 = vector.broadcast %56 : vector<1x128xf32> to vector<128x128xf32>
    %58 = arith.mulf %55, %57 : vector<128x128xf32>
    %59 = arith.addf %47, %58 : vector<128x128xf32>
    %c0_i32_40 = arith.constant 0 : i32
    %60 = vector.broadcast %c0_i32_40 : i32 to vector<128x128xi32>
    %61 = arith.cmpi eq, %24, %60 : vector<128x128xi32>
    %c127_i32_41 = arith.constant 127 : i32
    %62 = tpu.dynamic_rotate %49 by %c127_i32_41 dim 1 : vector<128x128xf32>, i32 -> vector<128x128xf32>
    %63 = arith.select %61, %62, %49 : vector<128x128xi1>, vector<128x128xf32>
    %64 = vector.extract_strided_slice %51 {offsets = [1, 0], sizes = [1, 128], strides = [1, 1]} : vector<2x128xf32> to vector<1x128xf32>
    %65 = vector.broadcast %64 : vector<1x128xf32> to vector<128x128xf32>
    %66 = arith.mulf %63, %65 : vector<128x128xf32>
    %67 = arith.addf %59, %66 : vector<128x128xf32>
    %c4_42 = arith.constant 4 : index
    %c0_43 = arith.constant 0 : index
    %c0_44 = arith.constant 0 : index
    %c0_45 = arith.constant 0 : index
    %68 = vector.load %arg5[%c4_42, %c0_43, %c0_44, %c0_45] : memref<6x10x8x128xf32, #tpu.memory_space<vmem>>, vector<2x8x8x128xf32>
    %69 = vector.shape_cast %68 : vector<2x8x8x128xf32> to vector<128x128xf32>
    %c2_46 = arith.constant 2 : index
    %c0_47 = arith.constant 0 : index
    %c0_48 = arith.constant 0 : index
    %70 = vector.load %arg2[%c2_46, %c0_47, %c0_48] : memref<9x2x128xf32, #tpu.memory_space<vmem>>, vector<1x2x128xf32>
    %71 = vector.shape_cast %70 : vector<1x2x128xf32> to vector<2x128xf32>
    %c1_i32_49 = arith.constant 1 : i32
    %72 = vector.broadcast %c1_i32_49 : i32 to vector<128x128xi32>
    %73 = arith.cmpi eq, %24, %72 : vector<128x128xi32>
    %c1_i32_50 = arith.constant 1 : i32
    %74 = tpu.dynamic_rotate %69 by %c1_i32_50 dim 1 : vector<128x128xf32>, i32 -> vector<128x128xf32>
    %75 = arith.select %73, %74, %69 : vector<128x128xi1>, vector<128x128xf32>
    %76 = vector.extract_strided_slice %71 {offsets = [0, 0], sizes = [1, 128], strides = [1, 1]} : vector<2x128xf32> to vector<1x128xf32>
    %77 = vector.broadcast %76 : vector<1x128xf32> to vector<128x128xf32>
    %78 = arith.mulf %75, %77 : vector<128x128xf32>
    %79 = arith.addf %67, %78 : vector<128x128xf32>
    %c0_i32_51 = arith.constant 0 : i32
    %80 = vector.broadcast %c0_i32_51 : i32 to vector<128x128xi32>
    %81 = arith.cmpi eq, %24, %80 : vector<128x128xi32>
    %c127_i32_52 = arith.constant 127 : i32
    %82 = tpu.dynamic_rotate %69 by %c127_i32_52 dim 1 : vector<128x128xf32>, i32 -> vector<128x128xf32>
    %83 = arith.select %81, %82, %69 : vector<128x128xi1>, vector<128x128xf32>
    %84 = vector.extract_strided_slice %71 {offsets = [1, 0], sizes = [1, 128], strides = [1, 1]} : vector<2x128xf32> to vector<1x128xf32>
    %85 = vector.broadcast %84 : vector<1x128xf32> to vector<128x128xf32>
    %86 = arith.mulf %83, %85 : vector<128x128xf32>
    %87 = arith.addf %79, %86 : vector<128x128xf32>
    %c0_53 = arith.constant 0 : index
    %c1_54 = arith.constant 1 : index
    %c0_55 = arith.constant 0 : index
    %c0_56 = arith.constant 0 : index
    %88 = vector.load %arg5[%c0_53, %c1_54, %c0_55, %c0_56] : memref<6x10x8x128xf32, #tpu.memory_space<vmem>>, vector<2x8x8x128xf32>
    %89 = vector.shape_cast %88 : vector<2x8x8x128xf32> to vector<128x128xf32>
    %c3 = arith.constant 3 : index
    %c0_57 = arith.constant 0 : index
    %c0_58 = arith.constant 0 : index
    %90 = vector.load %arg2[%c3, %c0_57, %c0_58] : memref<9x2x128xf32, #tpu.memory_space<vmem>>, vector<1x2x128xf32>
    %91 = vector.shape_cast %90 : vector<1x2x128xf32> to vector<2x128xf32>
    %c1_i32_59 = arith.constant 1 : i32
    %92 = vector.broadcast %c1_i32_59 : i32 to vector<128x128xi32>
    %93 = arith.cmpi eq, %24, %92 : vector<128x128xi32>
    %c1_i32_60 = arith.constant 1 : i32
    %94 = tpu.dynamic_rotate %89 by %c1_i32_60 dim 1 : vector<128x128xf32>, i32 -> vector<128x128xf32>
    %95 = arith.select %93, %94, %89 : vector<128x128xi1>, vector<128x128xf32>
    %96 = vector.extract_strided_slice %91 {offsets = [0, 0], sizes = [1, 128], strides = [1, 1]} : vector<2x128xf32> to vector<1x128xf32>
    %97 = vector.broadcast %96 : vector<1x128xf32> to vector<128x128xf32>
    %98 = arith.mulf %95, %97 : vector<128x128xf32>
    %99 = arith.addf %87, %98 : vector<128x128xf32>
    %c0_i32_61 = arith.constant 0 : i32
    %100 = vector.broadcast %c0_i32_61 : i32 to vector<128x128xi32>
    %101 = arith.cmpi eq, %24, %100 : vector<128x128xi32>
    %c127_i32_62 = arith.constant 127 : i32
    %102 = tpu.dynamic_rotate %89 by %c127_i32_62 dim 1 : vector<128x128xf32>, i32 -> vector<128x128xf32>
    %103 = arith.select %101, %102, %89 : vector<128x128xi1>, vector<128x128xf32>
    %104 = vector.extract_strided_slice %91 {offsets = [1, 0], sizes = [1, 128], strides = [1, 1]} : vector<2x128xf32> to vector<1x128xf32>
    %105 = vector.broadcast %104 : vector<1x128xf32> to vector<128x128xf32>
    %106 = arith.mulf %103, %105 : vector<128x128xf32>
    %107 = arith.addf %99, %106 : vector<128x128xf32>
    %c2_63 = arith.constant 2 : index
    %c1_64 = arith.constant 1 : index
    %c0_65 = arith.constant 0 : index
    %c0_66 = arith.constant 0 : index
    %108 = vector.load %arg5[%c2_63, %c1_64, %c0_65, %c0_66] : memref<6x10x8x128xf32, #tpu.memory_space<vmem>>, vector<2x8x8x128xf32>
    %109 = vector.shape_cast %108 : vector<2x8x8x128xf32> to vector<128x128xf32>
    %c4_67 = arith.constant 4 : index
    %c0_68 = arith.constant 0 : index
    %c0_69 = arith.constant 0 : index
    %110 = vector.load %arg2[%c4_67, %c0_68, %c0_69] : memref<9x2x128xf32, #tpu.memory_space<vmem>>, vector<1x2x128xf32>
    %111 = vector.shape_cast %110 : vector<1x2x128xf32> to vector<2x128xf32>
    %c1_i32_70 = arith.constant 1 : i32
    %112 = vector.broadcast %c1_i32_70 : i32 to vector<128x128xi32>
    %113 = arith.cmpi eq, %24, %112 : vector<128x128xi32>
    %c1_i32_71 = arith.constant 1 : i32
    %114 = tpu.dynamic_rotate %109 by %c1_i32_71 dim 1 : vector<128x128xf32>, i32 -> vector<128x128xf32>
    %115 = arith.select %113, %114, %109 : vector<128x128xi1>, vector<128x128xf32>
    %116 = vector.extract_strided_slice %111 {offsets = [0, 0], sizes = [1, 128], strides = [1, 1]} : vector<2x128xf32> to vector<1x128xf32>
    %117 = vector.broadcast %116 : vector<1x128xf32> to vector<128x128xf32>
    %118 = arith.mulf %115, %117 : vector<128x128xf32>
    %119 = arith.addf %107, %118 : vector<128x128xf32>
    %c0_i32_72 = arith.constant 0 : i32
    %120 = vector.broadcast %c0_i32_72 : i32 to vector<128x128xi32>
    %121 = arith.cmpi eq, %24, %120 : vector<128x128xi32>
    %c127_i32_73 = arith.constant 127 : i32
    %122 = tpu.dynamic_rotate %109 by %c127_i32_73 dim 1 : vector<128x128xf32>, i32 -> vector<128x128xf32>
    %123 = arith.select %121, %122, %109 : vector<128x128xi1>, vector<128x128xf32>
    %124 = vector.extract_strided_slice %111 {offsets = [1, 0], sizes = [1, 128], strides = [1, 1]} : vector<2x128xf32> to vector<1x128xf32>
    %125 = vector.broadcast %124 : vector<1x128xf32> to vector<128x128xf32>
    %126 = arith.mulf %123, %125 : vector<128x128xf32>
    %127 = arith.addf %119, %126 : vector<128x128xf32>
    %c4_74 = arith.constant 4 : index
    %c1_75 = arith.constant 1 : index
    %c0_76 = arith.constant 0 : index
    %c0_77 = arith.constant 0 : index
    %128 = vector.load %arg5[%c4_74, %c1_75, %c0_76, %c0_77] : memref<6x10x8x128xf32, #tpu.memory_space<vmem>>, vector<2x8x8x128xf32>
    %129 = vector.shape_cast %128 : vector<2x8x8x128xf32> to vector<128x128xf32>
    %c5 = arith.constant 5 : index
    %c0_78 = arith.constant 0 : index
    %c0_79 = arith.constant 0 : index
    %130 = vector.load %arg2[%c5, %c0_78, %c0_79] : memref<9x2x128xf32, #tpu.memory_space<vmem>>, vector<1x2x128xf32>
    %131 = vector.shape_cast %130 : vector<1x2x128xf32> to vector<2x128xf32>
    %c1_i32_80 = arith.constant 1 : i32
    %132 = vector.broadcast %c1_i32_80 : i32 to vector<128x128xi32>
    %133 = arith.cmpi eq, %24, %132 : vector<128x128xi32>
    %c1_i32_81 = arith.constant 1 : i32
    %134 = tpu.dynamic_rotate %129 by %c1_i32_81 dim 1 : vector<128x128xf32>, i32 -> vector<128x128xf32>
    %135 = arith.select %133, %134, %129 : vector<128x128xi1>, vector<128x128xf32>
    %136 = vector.extract_strided_slice %131 {offsets = [0, 0], sizes = [1, 128], strides = [1, 1]} : vector<2x128xf32> to vector<1x128xf32>
    %137 = vector.broadcast %136 : vector<1x128xf32> to vector<128x128xf32>
    %138 = arith.mulf %135, %137 : vector<128x128xf32>
    %139 = arith.addf %127, %138 : vector<128x128xf32>
    %c0_i32_82 = arith.constant 0 : i32
    %140 = vector.broadcast %c0_i32_82 : i32 to vector<128x128xi32>
    %141 = arith.cmpi eq, %24, %140 : vector<128x128xi32>
    %c127_i32_83 = arith.constant 127 : i32
    %142 = tpu.dynamic_rotate %129 by %c127_i32_83 dim 1 : vector<128x128xf32>, i32 -> vector<128x128xf32>
    %143 = arith.select %141, %142, %129 : vector<128x128xi1>, vector<128x128xf32>
    %144 = vector.extract_strided_slice %131 {offsets = [1, 0], sizes = [1, 128], strides = [1, 1]} : vector<2x128xf32> to vector<1x128xf32>
    %145 = vector.broadcast %144 : vector<1x128xf32> to vector<128x128xf32>
    %146 = arith.mulf %143, %145 : vector<128x128xf32>
    %147 = arith.addf %139, %146 : vector<128x128xf32>
    %c0_84 = arith.constant 0 : index
    %c2_85 = arith.constant 2 : index
    %c0_86 = arith.constant 0 : index
    %c0_87 = arith.constant 0 : index
    %148 = vector.load %arg5[%c0_84, %c2_85, %c0_86, %c0_87] : memref<6x10x8x128xf32, #tpu.memory_space<vmem>>, vector<2x8x8x128xf32>
    %149 = vector.shape_cast %148 : vector<2x8x8x128xf32> to vector<128x128xf32>
    %c6 = arith.constant 6 : index
    %c0_88 = arith.constant 0 : index
    %c0_89 = arith.constant 0 : index
    %150 = vector.load %arg2[%c6, %c0_88, %c0_89] : memref<9x2x128xf32, #tpu.memory_space<vmem>>, vector<1x2x128xf32>
    %151 = vector.shape_cast %150 : vector<1x2x128xf32> to vector<2x128xf32>
    %c1_i32_90 = arith.constant 1 : i32
    %152 = vector.broadcast %c1_i32_90 : i32 to vector<128x128xi32>
    %153 = arith.cmpi eq, %24, %152 : vector<128x128xi32>
    %c1_i32_91 = arith.constant 1 : i32
    %154 = tpu.dynamic_rotate %149 by %c1_i32_91 dim 1 : vector<128x128xf32>, i32 -> vector<128x128xf32>
    %155 = arith.select %153, %154, %149 : vector<128x128xi1>, vector<128x128xf32>
    %156 = vector.extract_strided_slice %151 {offsets = [0, 0], sizes = [1, 128], strides = [1, 1]} : vector<2x128xf32> to vector<1x128xf32>
    %157 = vector.broadcast %156 : vector<1x128xf32> to vector<128x128xf32>
    %158 = arith.mulf %155, %157 : vector<128x128xf32>
    %159 = arith.addf %147, %158 : vector<128x128xf32>
    %c0_i32_92 = arith.constant 0 : i32
    %160 = vector.broadcast %c0_i32_92 : i32 to vector<128x128xi32>
    %161 = arith.cmpi eq, %24, %160 : vector<128x128xi32>
    %c127_i32_93 = arith.constant 127 : i32
    %162 = tpu.dynamic_rotate %149 by %c127_i32_93 dim 1 : vector<128x128xf32>, i32 -> vector<128x128xf32>
    %163 = arith.select %161, %162, %149 : vector<128x128xi1>, vector<128x128xf32>
    %164 = vector.extract_strided_slice %151 {offsets = [1, 0], sizes = [1, 128], strides = [1, 1]} : vector<2x128xf32> to vector<1x128xf32>
    %165 = vector.broadcast %164 : vector<1x128xf32> to vector<128x128xf32>
    %166 = arith.mulf %163, %165 : vector<128x128xf32>
    %167 = arith.addf %159, %166 : vector<128x128xf32>
    %c2_94 = arith.constant 2 : index
    %c2_95 = arith.constant 2 : index
    %c0_96 = arith.constant 0 : index
    %c0_97 = arith.constant 0 : index
    %168 = vector.load %arg5[%c2_94, %c2_95, %c0_96, %c0_97] : memref<6x10x8x128xf32, #tpu.memory_space<vmem>>, vector<2x8x8x128xf32>
    %169 = vector.shape_cast %168 : vector<2x8x8x128xf32> to vector<128x128xf32>
    %c7 = arith.constant 7 : index
    %c0_98 = arith.constant 0 : index
    %c0_99 = arith.constant 0 : index
    %170 = vector.load %arg2[%c7, %c0_98, %c0_99] : memref<9x2x128xf32, #tpu.memory_space<vmem>>, vector<1x2x128xf32>
    %171 = vector.shape_cast %170 : vector<1x2x128xf32> to vector<2x128xf32>
    %c1_i32_100 = arith.constant 1 : i32
    %172 = vector.broadcast %c1_i32_100 : i32 to vector<128x128xi32>
    %173 = arith.cmpi eq, %24, %172 : vector<128x128xi32>
    %c1_i32_101 = arith.constant 1 : i32
    %174 = tpu.dynamic_rotate %169 by %c1_i32_101 dim 1 : vector<128x128xf32>, i32 -> vector<128x128xf32>
    %175 = arith.select %173, %174, %169 : vector<128x128xi1>, vector<128x128xf32>
    %176 = vector.extract_strided_slice %171 {offsets = [0, 0], sizes = [1, 128], strides = [1, 1]} : vector<2x128xf32> to vector<1x128xf32>
    %177 = vector.broadcast %176 : vector<1x128xf32> to vector<128x128xf32>
    %178 = arith.mulf %175, %177 : vector<128x128xf32>
    %179 = arith.addf %167, %178 : vector<128x128xf32>
    %c0_i32_102 = arith.constant 0 : i32
    %180 = vector.broadcast %c0_i32_102 : i32 to vector<128x128xi32>
    %181 = arith.cmpi eq, %24, %180 : vector<128x128xi32>
    %c127_i32_103 = arith.constant 127 : i32
    %182 = tpu.dynamic_rotate %169 by %c127_i32_103 dim 1 : vector<128x128xf32>, i32 -> vector<128x128xf32>
    %183 = arith.select %181, %182, %169 : vector<128x128xi1>, vector<128x128xf32>
    %184 = vector.extract_strided_slice %171 {offsets = [1, 0], sizes = [1, 128], strides = [1, 1]} : vector<2x128xf32> to vector<1x128xf32>
    %185 = vector.broadcast %184 : vector<1x128xf32> to vector<128x128xf32>
    %186 = arith.mulf %183, %185 : vector<128x128xf32>
    %187 = arith.addf %179, %186 : vector<128x128xf32>
    %c4_104 = arith.constant 4 : index
    %c2_105 = arith.constant 2 : index
    %c0_106 = arith.constant 0 : index
    %c0_107 = arith.constant 0 : index
    %188 = vector.load %arg5[%c4_104, %c2_105, %c0_106, %c0_107] : memref<6x10x8x128xf32, #tpu.memory_space<vmem>>, vector<2x8x8x128xf32>
    %189 = vector.shape_cast %188 : vector<2x8x8x128xf32> to vector<128x128xf32>
    %c8 = arith.constant 8 : index
    %c0_108 = arith.constant 0 : index
    %c0_109 = arith.constant 0 : index
    %190 = vector.load %arg2[%c8, %c0_108, %c0_109] : memref<9x2x128xf32, #tpu.memory_space<vmem>>, vector<1x2x128xf32>
    %191 = vector.shape_cast %190 : vector<1x2x128xf32> to vector<2x128xf32>
    %c1_i32_110 = arith.constant 1 : i32
    %192 = vector.broadcast %c1_i32_110 : i32 to vector<128x128xi32>
    %193 = arith.cmpi eq, %24, %192 : vector<128x128xi32>
    %c1_i32_111 = arith.constant 1 : i32
    %194 = tpu.dynamic_rotate %189 by %c1_i32_111 dim 1 : vector<128x128xf32>, i32 -> vector<128x128xf32>
    %195 = arith.select %193, %194, %189 : vector<128x128xi1>, vector<128x128xf32>
    %196 = vector.extract_strided_slice %191 {offsets = [0, 0], sizes = [1, 128], strides = [1, 1]} : vector<2x128xf32> to vector<1x128xf32>
    %197 = vector.broadcast %196 : vector<1x128xf32> to vector<128x128xf32>
    %198 = arith.mulf %195, %197 : vector<128x128xf32>
    %199 = arith.addf %187, %198 : vector<128x128xf32>
    %c0_i32_112 = arith.constant 0 : i32
    %200 = vector.broadcast %c0_i32_112 : i32 to vector<128x128xi32>
    %201 = arith.cmpi eq, %24, %200 : vector<128x128xi32>
    %c127_i32_113 = arith.constant 127 : i32
    %202 = tpu.dynamic_rotate %189 by %c127_i32_113 dim 1 : vector<128x128xf32>, i32 -> vector<128x128xf32>
    %203 = arith.select %201, %202, %189 : vector<128x128xi1>, vector<128x128xf32>
    %204 = vector.extract_strided_slice %191 {offsets = [1, 0], sizes = [1, 128], strides = [1, 1]} : vector<2x128xf32> to vector<1x128xf32>
    %205 = vector.broadcast %204 : vector<1x128xf32> to vector<128x128xf32>
    %206 = arith.mulf %203, %205 : vector<128x128xf32>
    %207 = arith.addf %199, %206 : vector<128x128xf32>
    %208 = vector.shape_cast %207 : vector<128x128xf32> to vector<2x8x8x128xf32>
    %c0_114 = arith.constant 0 : index
    %c0_115 = arith.constant 0 : index
    %c0_116 = arith.constant 0 : index
    %c0_117 = arith.constant 0 : index
    %209 = vector.load %arg4[%c0_114, %c0_115, %c0_116, %c0_117] : memref<2x8x8x128xf32, #tpu.memory_space<vmem>>, vector<2x8x8x128xf32>
    tpu.vector_store %arg4[%c0_114, %c0_115, %c0_116, %c0_117], %208 {strides = array<i32>} : memref<2x8x8x128xf32, #tpu.memory_space<vmem>>, vector<2x8x8x128xf32>,
    return
  }
  func.func @transform_0(%arg0: i32) -> (i32, i32, i32, i32) {
    %c0_i32 = arith.constant 0 : i32
    %c0_i32_0 = arith.constant 0 : i32
    %c0_i32_1 = arith.constant 0 : i32
    %c0_i32_2 = arith.constant 0 : i32
    %c0_i32_3 = arith.constant 0 : i32
    return %c0_i32, %c0_i32_0, %c0_i32_1, %c0_i32_2 : i32, i32, i32, i32
  }
  func.func @transform_1(%arg0: i32) -> (i32, i32, i32) {
    %c0_i32 = arith.constant 0 : i32
    %c0_i32_0 = arith.constant 0 : i32
    %c0_i32_1 = arith.constant 0 : i32
    %c0_i32_2 = arith.constant 0 : i32
    return %c0_i32, %c0_i32_0, %c0_i32_1 : i32, i32, i32
  }
  func.func @transform_2(%arg0: i32) -> (i32, i32) {
    %c0_i32 = arith.constant 0 : i32
    %c0_i32_0 = arith.constant 0 : i32
    %c0_i32_1 = arith.constant 0 : i32
    return %c0_i32, %c0_i32_0 : i32, i32
  }
  func.func @transform_3(%arg0: i32) -> (i32, i32, i32, i32) {
    %c0_i32 = arith.constant 0 : i32
    %c0_i32_0 = arith.constant 0 : i32
    %c0_i32_1 = arith.constant 0 : i32
    %c0_i32_2 = arith.constant 0 : i32
    %c0_i32_3 = arith.constant 0 : i32
    return %c0_i32, %c0_i32_0, %c0_i32_1, %c0_i32_2 : i32, i32, i32, i32
  }
}

</mosaic_0001>

<llo_original>
// kernel: tpu_custom_call.1
$region0: #{tpu_custom_call.1}
  #allocation0 [shape = 'u32[]', space=smem, size = 0x4, offset = 0x4, fixed_abs, tag = 'smem constant byte address 0x4 - core index']
  #allocation1 [shape = 'u32[144,128]{1,0:T(1,128)}', space=vmem, size = 0x12000, scoped, tag = 'internal scratch']
  #allocation2 [shape = 'f32[6,10,8,128]{3,2,1,0:T(8,128)}', space=vmem, size = 0x3c000, scoped, tag = 'scratch operand']
  %s0 = inlined_call_operand.hbm [shape: f32[2,8,8,128], index: 0, kind: input, shape index: {}]
  %s1 = inlined_call_operand.hbm [shape: f32[9,2,128], index: 1, kind: input, shape index: {}]
  %s2 = inlined_call_operand.vmem [shape: f32[1,128], index: 2, kind: input, shape index: {}]
  %s3 = inlined_call_operand.hbm [shape: f32[2,8,8,128], index: 3, kind: output, shape index: {}]
  %s4 = sld [smem:[#allocation0]]
  $region30: #{tpu_custom_call.1} parent=0
    _
  %s6 = ssub.s32 1, %s4
  %s7 = scalar_select 0, %s6, %s4
  $region1: #{tpu_custom_call.1} parent=0
    #allocation3 [shape = 'u8[65536]{0}', space=vmem, size = 0x10000, scoped, tag = 'input window, operand 0, single buffered']
    #allocation4 [shape = 's32[1]{0}', space=sflag, size = 0x4, scoped, tag = 'scoped memory for tpu_custom_call.1']
    #allocation5 [shape = 's32[1]{0}', space=sflag, size = 0x4, scoped, tag = 'scoped memory for tpu_custom_call.1']
    #allocation6 [shape = 'u8[9216]{0}', space=vmem, size = 0x2400, scoped, tag = 'input window, operand 1, single buffered']
    #allocation7 [shape = 's32[1]{0}', space=sflag, size = 0x4, scoped, tag = 'scoped memory for tpu_custom_call.1']
    #allocation8 [shape = 'u8[65536]{0}', space=vmem, size = 0x10000, scoped, tag = 'output window, operand 0, single buffered']
    %8 = vsyncpa [#allocation4], 0
    %9 = vsyncpa [#allocation7], 0
    %10 = vsyncpa [#allocation5], 0
    // Predicated region
    $region2: #{tpu_custom_call.1} parent=1 // pred_check
      _
    $region3: #{tpu_custom_call.1} parent=1 // pred_check_branch
      %12 = sbr.rel (0) target = $region5
    $region4: #{tpu_custom_call.1} parent=1 // pred_region
      %s14 = ssub.s32 2048, 2048
      %15 = vsyncadd [#allocation4], %s14
      %s16 = sshll.u32 [#allocation3], 4
      %s17 = int_to_ptr.vmem [resolvable:$true] %s16
      %22 = dma.hbm_to_vmem [thread:$0]  %s0, 2048, %s17, [#allocation4], 128, 128, 8
    $region5: #{tpu_custom_call.1} parent=1 // pred_fallthru
      _
    // Predicated region
    $region6: #{tpu_custom_call.1} parent=1 // pred_check
      _
    $region7: #{tpu_custom_call.1} parent=1 // pred_check_branch
      %24 = sbr.rel (0) target = $region9
    $region8: #{tpu_custom_call.1} parent=1 // pred_region
      %s26 = ssub.s32 288, 288
      %27 = vsyncadd [#allocation7], %s26
      %s28 = sshll.u32 [#allocation6], 4
      %s29 = int_to_ptr.vmem [resolvable:$true] %s28
      %34 = dma.hbm_to_vmem [thread:$0]  %s1, 288, %s29, [#allocation7], 32, 32, 2
    $region9: #{tpu_custom_call.1} parent=1 // pred_fallthru
      _
    // Predicated region
    $region10: #{tpu_custom_call.1} parent=1 // pred_check
      _
    $region11: #{tpu_custom_call.1} parent=1 // pred_check_branch
      %36 = sbr.rel (0) target = $region13
    $region12: #{tpu_custom_call.1} parent=1 // pred_region
      _
    $region13: #{tpu_custom_call.1} parent=1 // pred_fallthru
      _
    // Predicated region
    $region14: #{tpu_custom_call.1} parent=1 // pred_check
      _
    $region15: #{tpu_custom_call.1} parent=1 // pred_check_branch
      %38 = sbr.rel (0) target = $region17
    $region16: #{tpu_custom_call.1} parent=1 // pred_region
      %39 = dma.done [#allocation4], 2048
    $region17: #{tpu_custom_call.1} parent=1 // pred_fallthru
      _
    // Predicated region
    $region18: #{tpu_custom_call.1} parent=1 // pred_check
      _
    $region19: #{tpu_custom_call.1} parent=1 // pred_check_branch
      %41 = sbr.rel (0) target = $region21
    $region20: #{tpu_custom_call.1} parent=1 // pred_region
      %42 = dma.done [#allocation7], 288
    $region21: #{tpu_custom_call.1} parent=1 // pred_fallthru
      _
    %v43 = vld [vmem:[#allocation3] sm:$0xff]
    %v44 = vld [vmem:[#allocation3 + $0x8] sm:$0xff]
    %v45 = vld [vmem:[#allocation3 + $0x10] sm:$0xff]
    %v46 = vld [vmem:[#allocation3 + $0x18] sm:$0xff]
    %v47 = vld [vmem:[#allocation3 + $0x20] sm:$0xff]
    %v48 = vld [vmem:[#allocation3 + $0x28] sm:$0xff]
    %v49 = vld [vmem:[#allocation3 + $0x30] sm:$0xff]
    %v50 = vld [vmem:[#allocation3 + $0x38] sm:$0xff]
    %v51 = vld [vmem:[#allocation3 + $0x40] sm:$0xff]
    %v52 = vld [vmem:[#allocation3 + $0x48] sm:$0xff]
    %v53 = vld [vmem:[#allocation3 + $0x50] sm:$0xff]
    %v54 = vld [vmem:[#allocation3 + $0x58] sm:$0xff]
    %v55 = vld [vmem:[#allocation3 + $0x60] sm:$0xff]
    %v56 = vld [vmem:[#allocation3 + $0x68] sm:$0xff]
    %v57 = vld [vmem:[#allocation3 + $0x70] sm:$0xff]
    %v58 = vld [vmem:[#allocation3 + $0x78] sm:$0xff]
    %59 = vst [vmem:[#allocation2] sm:$0xff] 0.0
    %60 = vst [vmem:[#allocation2 + $0x8] sm:$0xff] 0.0
    %61 = vst [vmem:[#allocation2 + $0x10] sm:$0xff] 0.0
    %62 = vst [vmem:[#allocation2 + $0x18] sm:$0xff] 0.0
    %63 = vst [vmem:[#allocation2 + $0x20] sm:$0xff] 0.0
    %64 = vst [vmem:[#allocation2 + $0x28] sm:$0xff] 0.0
    %65 = vst [vmem:[#allocation2 + $0x30] sm:$0xff] 0.0
    %66 = vst [vmem:[#allocation2 + $0x38] sm:$0xff] 0.0
    %67 = vst [vmem:[#allocation2 + $0x40] sm:$0xff] 0.0
    %68 = vst [vmem:[#allocation2 + $0x48] sm:$0xff] 0.0
    %69 = vst [vmem:[#allocation2 + $0x50] sm:$0xff] 0.0
    %70 = vst [vmem:[#allocation2 + $0x58] sm:$0xff] 0.0
    %71 = vst [vmem:[#allocation2 + $0x60] sm:$0xff] 0.0
    %72 = vst [vmem:[#allocation2 + $0x68] sm:$0xff] 0.0
    %73 = vst [vmem:[#allocation2 + $0x70] sm:$0xff] 0.0
    %74 = vst [vmem:[#allocation2 + $0x78] sm:$0xff] 0.0
    %75 = vst [vmem:[#allocation2 + $0x80] sm:$0xff] 0.0
    %76 = vst [vmem:[#allocation2 + $0x88] sm:$0xff] 0.0
    %77 = vst [vmem:[#allocation2 + $0x90] sm:$0xff] 0.0
    %78 = vst [vmem:[#allocation2 + $0x98] sm:$0xff] 0.0
    %79 = vst [vmem:[#allocation2 + $0xa0] sm:$0xff] 0.0
    %80 = vst [vmem:[#allocation2 + $0xa8] sm:$0xff] 0.0
    %81 = vst [vmem:[#allocation2 + $0xb0] sm:$0xff] 0.0
    %82 = vst [vmem:[#allocation2 + $0xb8] sm:$0xff] 0.0
    %83 = vst [vmem:[#allocation2 + $0xc0] sm:$0xff] 0.0
    %84 = vst [vmem:[#allocation2 + $0xc8] sm:$0xff] 0.0
    %85 = vst [vmem:[#allocation2 + $0xd0] sm:$0xff] 0.0
    %86 = vst [vmem:[#allocation2 + $0xd8] sm:$0xff] 0.0
    %87 = vst [vmem:[#allocation2 + $0xe0] sm:$0xff] 0.0
    %88 = vst [vmem:[#allocation2 + $0xe8] sm:$0xff] 0.0
    %89 = vst [vmem:[#allocation2 + $0xf0] sm:$0xff] 0.0
    %90 = vst [vmem:[#allocation2 + $0xf8] sm:$0xff] 0.0
    %91 = vst [vmem:[#allocation2 + $0x100] sm:$0xff] 0.0
    %92 = vst [vmem:[#allocation2 + $0x108] sm:$0xff] 0.0
    %93 = vst [vmem:[#allocation2 + $0x110] sm:$0xff] 0.0
    %94 = vst [vmem:[#allocation2 + $0x118] sm:$0xff] 0.0
    %95 = vst [vmem:[#allocation2 + $0x120] sm:$0xff] 0.0
    %96 = vst [vmem:[#allocation2 + $0x128] sm:$0xff] 0.0
    %97 = vst [vmem:[#allocation2 + $0x130] sm:$0xff] 0.0
    %98 = vst [vmem:[#allocation2 + $0x138] sm:$0xff] 0.0
    %99 = vst [vmem:[#allocation2 + $0x140] sm:$0xff] 0.0
    %100 = vst [vmem:[#allocation2 + $0x148] sm:$0xff] 0.0
    %101 = vst [vmem:[#allocation2 + $0x150] sm:$0xff] 0.0
    %102 = vst [vmem:[#allocation2 + $0x158] sm:$0xff] 0.0
    %103 = vst [vmem:[#allocation2 + $0x160] sm:$0xff] 0.0
    %104 = vst [vmem:[#allocation2 + $0x168] sm:$0xff] 0.0
    %105 = vst [vmem:[#allocation2 + $0x170] sm:$0xff] 0.0
    %106 = vst [vmem:[#allocation2 + $0x178] sm:$0xff] 0.0
    %107 = vst [vmem:[#allocation2 + $0x180] sm:$0xff] 0.0
    %108 = vst [vmem:[#allocation2 + $0x188] sm:$0xff] 0.0
    %109 = vst [vmem:[#allocation2 + $0x190] sm:$0xff] 0.0
    %110 = vst [vmem:[#allocation2 + $0x198] sm:$0xff] 0.0
    %111 = vst [vmem:[#allocation2 + $0x1a0] sm:$0xff] 0.0
    %112 = vst [vmem:[#allocation2 + $0x1a8] sm:$0xff] 0.0
    %113 = vst [vmem:[#allocation2 + $0x1b0] sm:$0xff] 0.0
    %114 = vst [vmem:[#allocation2 + $0x1b8] sm:$0xff] 0.0
    %115 = vst [vmem:[#allocation2 + $0x1c0] sm:$0xff] 0.0
    %116 = vst [vmem:[#allocation2 + $0x1c8] sm:$0xff] 0.0
    %117 = vst [vmem:[#allocation2 + $0x1d0] sm:$0xff] 0.0
    %118 = vst [vmem:[#allocation2 + $0x1d8] sm:$0xff] 0.0
    %s119 = scalar_lea.vmem [#allocation2], 8
    %120 = vst [vmem:[%s119 + $0x1] sm:$0x7f] %v43
    %121 = vst [vmem:[%s119 + $0x9] sm:$0x7f] %v44
    %122 = vst [vmem:[%s119 + $0x11] sm:$0x7f] %v45
    %123 = vst [vmem:[%s119 + $0x19] sm:$0x7f] %v46
    %124 = vst [vmem:[%s119 + $0x21] sm:$0x7f] %v47
    %125 = vst [vmem:[%s119 + $0x29] sm:$0x7f] %v48
    %126 = vst [vmem:[%s119 + $0x31] sm:$0x7f] %v49
    %127 = vst [vmem:[%s119 + $0x39] sm:$0x7f] %v50
    %128 = vst [vmem:[%s119 + $0x51] sm:$0x7f] %v51
    %129 = vst [vmem:[%s119 + $0x59] sm:$0x7f] %v52
    %130 = vst [vmem:[%s119 + $0x61] sm:$0x7f] %v53
    %131 = vst [vmem:[%s119 + $0x69] sm:$0x7f] %v54
    %132 = vst [vmem:[%s119 + $0x71] sm:$0x7f] %v55
    %133 = vst [vmem:[%s119 + $0x79] sm:$0x7f] %v56
    %134 = vst [vmem:[%s119 + $0x81] sm:$0x7f] %v57
    %135 = vst [vmem:[%s119 + $0x89] sm:$0x7f] %v58
    %s136 = scalar_lea.vmem [#allocation2], 168
    %137 = vst [vmem:[%s136] sm:$0xff] %v43
    %138 = vst [vmem:[%s136 + $0x8] sm:$0xff] %v44
    %139 = vst [vmem:[%s136 + $0x10] sm:$0xff] %v45
    %140 = vst [vmem:[%s136 + $0x18] sm:$0xff] %v46
    %141 = vst [vmem:[%s136 + $0x20] sm:$0xff] %v47
    %142 = vst [vmem:[%s136 + $0x28] sm:$0xff] %v48
    %143 = vst [vmem:[%s136 + $0x30] sm:$0xff] %v49
    %144 = vst [vmem:[%s136 + $0x38] sm:$0xff] %v50
    %145 = vst [vmem:[%s136 + $0x50] sm:$0xff] %v51
    %146 = vst [vmem:[%s136 + $0x58] sm:$0xff] %v52
    %147 = vst [vmem:[%s136 + $0x60] sm:$0xff] %v53
    %148 = vst [vmem:[%s136 + $0x68] sm:$0xff] %v54
    %149 = vst [vmem:[%s136 + $0x70] sm:$0xff] %v55
    %150 = vst [vmem:[%s136 + $0x78] sm:$0xff] %v56
    %151 = vst [vmem:[%s136 + $0x80] sm:$0xff] %v57
    %152 = vst [vmem:[%s136 + $0x88] sm:$0xff] %v58
    %s153 = scalar_lea.vmem [#allocation2], 328
    %154 = vst [vmem:[%s153 - $0x1] sm:$0xfe] %v43
    %155 = vst [vmem:[%s153 + $0x7] sm:$0xfe] %v44
    %156 = vst [vmem:[%s153 + $0xf] sm:$0xfe] %v45
    %157 = vst [vmem:[%s153 + $0x17] sm:$0xfe] %v46
    %158 = vst [vmem:[%s153 + $0x1f] sm:$0xfe] %v47
    %159 = vst [vmem:[%s153 + $0x27] sm:$0xfe] %v48
    %160 = vst [vmem:[%s153 + $0x2f] sm:$0xfe] %v49
    %161 = vst [vmem:[%s153 + $0x37] sm:$0xfe] %v50
    %162 = vst [vmem:[%s153 + $0x4f] sm:$0xfe] %v51
    %163 = vst [vmem:[%s153 + $0x57] sm:$0xfe] %v52
    %164 = vst [vmem:[%s153 + $0x5f] sm:$0xfe] %v53
    %165 = vst [vmem:[%s153 + $0x67] sm:$0xfe] %v54
    %166 = vst [vmem:[%s153 + $0x6f] sm:$0xfe] %v55
    %167 = vst [vmem:[%s153 + $0x77] sm:$0xfe] %v56
    %168 = vst [vmem:[%s153 + $0x7f] sm:$0xfe] %v57
    %169 = vst [vmem:[%s153 + $0x87] sm:$0xfe] %v58
    %v170 = vlaneseq
    %v171 = vand.u32 %v170, 127
    %vm172 = vcmp.lt.s32.totalorder %v171, 0
    %v173 = vsub.s32 0, %v171
    %v174 = vsel %vm172, %v173, %v171
    %v175 = vshrl.u32 %v174, 1
    %v176 = vand.u32 %v174, 1
    %v177 = vsub.s32 0, %v176
    %v178 = vsel %vm172, %v177, %v176
    %vm179 = vcmp.ne.s32.totalorder %v178, 0
    %vm180 = vcmp.lt.s32.totalorder %v178, 0
    %vm181 = vmand %vm180, %vm179
    %v182 = vadd.s32 %v178, 2
    %v183 = vsel %vm181, %v182, %v178
    %v184 = vld [vmem:[%s2] sm:$0x1]
    %v186 = vlaneseq
    %v187 = vshrl.u32 %v186, 7
    %v188 = vsub.s32 0, %v187
    %v189 = vrot.slane %v184, %v188
    %v191 = vld [vmem:[#allocation2] sm:$0xff]
    %v192 = vld [vmem:[#allocation2 + $0x8] sm:$0xff]
    %v193 = vld [vmem:[#allocation2 + $0x10] sm:$0xff]
    %v194 = vld [vmem:[#allocation2 + $0x18] sm:$0xff]
    %v195 = vld [vmem:[#allocation2 + $0x20] sm:$0xff]
    %v196 = vld [vmem:[#allocation2 + $0x28] sm:$0xff]
    %v197 = vld [vmem:[#allocation2 + $0x30] sm:$0xff]
    %v198 = vld [vmem:[#allocation2 + $0x38] sm:$0xff]
    %v199 = vld [vmem:[#allocation2 + $0x50] sm:$0xff]
    %v200 = vld [vmem:[#allocation2 + $0x58] sm:$0xff]
    %v201 = vld [vmem:[#allocation2 + $0x60] sm:$0xff]
    %v202 = vld [vmem:[#allocation2 + $0x68] sm:$0xff]
    %v203 = vld [vmem:[#allocation2 + $0x70] sm:$0xff]
    %v204 = vld [vmem:[#allocation2 + $0x78] sm:$0xff]
    %v205 = vld [vmem:[#allocation2 + $0x80] sm:$0xff]
    %v206 = vld [vmem:[#allocation2 + $0x88] sm:$0xff]
    %v207 = vld [vmem:[#allocation6] sm:$0x3]
    %vm208 = vcmp.eq.s32.totalorder %v183, 1
    %209 = vrot.lane.b32.xlu0 %v191, 1
    %v210 = vpop.permute.xlu0 %209
    %211 = vrot.lane.b32.xlu0 %v192, 1
    %v212 = vpop.permute.xlu0 %211
    %213 = vrot.lane.b32.xlu0 %v193, 1
    %v214 = vpop.permute.xlu0 %213
    %215 = vrot.lane.b32.xlu0 %v194, 1
    %v216 = vpop.permute.xlu0 %215
    %217 = vrot.lane.b32.xlu0 %v195, 1
    %v218 = vpop.permute.xlu0 %217
    %219 = vrot.lane.b32.xlu0 %v196, 1
    %v220 = vpop.permute.xlu0 %219
    %221 = vrot.lane.b32.xlu0 %v197, 1
    %v222 = vpop.permute.xlu0 %221
    %223 = vrot.lane.b32.xlu0 %v198, 1
    %v224 = vpop.permute.xlu0 %223
    %225 = vrot.lane.b32.xlu0 %v199, 1
    %v226 = vpop.permute.xlu0 %225
    %227 = vrot.lane.b32.xlu0 %v200, 1
    %v228 = vpop.permute.xlu0 %227
    %229 = vrot.lane.b32.xlu0 %v201, 1
    %v230 = vpop.permute.xlu0 %229
    %231 = vrot.lane.b32.xlu0 %v202, 1
    %v232 = vpop.permute.xlu0 %231
    %233 = vrot.lane.b32.xlu0 %v203, 1
    %v234 = vpop.permute.xlu0 %233
    %235 = vrot.lane.b32.xlu0 %v204, 1
    %v236 = vpop.permute.xlu0 %235
    %237 = vrot.lane.b32.xlu0 %v205, 1
    %v238 = vpop.permute.xlu0 %237
    %239 = vrot.lane.b32.xlu0 %v206, 1
    %v240 = vpop.permute.xlu0 %239
    %v241 = vsel %vm208, %v210, %v191
    %v242 = vsel %vm208, %v212, %v192
    %v243 = vsel %vm208, %v214, %v193
    %v244 = vsel %vm208, %v216, %v194
    %v245 = vsel %vm208, %v218, %v195
    %v246 = vsel %vm208, %v220, %v196
    %v247 = vsel %vm208, %v222, %v197
    %v248 = vsel %vm208, %v224, %v198
    %v249 = vsel %vm208, %v226, %v199
    %v250 = vsel %vm208, %v228, %v200
    %v251 = vsel %vm208, %v230, %v201
    %v252 = vsel %vm208, %v232, %v202
    %v253 = vsel %vm208, %v234, %v203
    %v254 = vsel %vm208, %v236, %v204
    %v255 = vsel %vm208, %v238, %v205
    %v256 = vsel %vm208, %v240, %v206
    %v257 = vlaneseq
    %v258 = vshrl.u32 %v257, 7
    %v259 = vsub.s32 0, %v258
    %v260 = vrot.slane %v207, %v259
    %v261 = vmul.f32 %v241, %v260
    %v262 = vmul.f32 %v242, %v260
    %v263 = vmul.f32 %v243, %v260
    %v264 = vmul.f32 %v244, %v260
    %v265 = vmul.f32 %v245, %v260
    %v266 = vmul.f32 %v246, %v260
    %v267 = vmul.f32 %v247, %v260
    %v268 = vmul.f32 %v248, %v260
    %v269 = vmul.f32 %v249, %v260
    %v270 = vmul.f32 %v250, %v260
    %v271 = vmul.f32 %v251, %v260
    %v272 = vmul.f32 %v252, %v260
    %v273 = vmul.f32 %v253, %v260
    %v274 = vmul.f32 %v254, %v260
    %v275 = vmul.f32 %v255, %v260
    %v276 = vmul.f32 %v256, %v260
    %v277 = vadd.f32 %v189, %v261
    %v278 = vadd.f32 %v189, %v262
    %v279 = vadd.f32 %v189, %v263
    %v280 = vadd.f32 %v189, %v264
    %v281 = vadd.f32 %v189, %v265
    %v282 = vadd.f32 %v189, %v266
    %v283 = vadd.f32 %v189, %v267
    %v284 = vadd.f32 %v189, %v268
    %v285 = vadd.f32 %v189, %v269
    %v286 = vadd.f32 %v189, %v270
    %v287 = vadd.f32 %v189, %v271
    %v288 = vadd.f32 %v189, %v272
    %v289 = vadd.f32 %v189, %v273
    %v290 = vadd.f32 %v189, %v274
    %v291 = vadd.f32 %v189, %v275
    %v292 = vadd.f32 %v189, %v276
    %vm293 = vcmp.eq.s32.totalorder %v183, 0
    %294 = vrot.lane.b32.xlu0 %v191, 127
    %v295 = vpop.permute.xlu0 %294
    %296 = vrot.lane.b32.xlu0 %v192, 127
    %v297 = vpop.permute.xlu0 %296
    %298 = vrot.lane.b32.xlu0 %v193, 127
    %v299 = vpop.permute.xlu0 %298
    %300 = vrot.lane.b32.xlu0 %v194, 127
    %v301 = vpop.permute.xlu0 %300
    %302 = vrot.lane.b32.xlu0 %v195, 127
    %v303 = vpop.permute.xlu0 %302
    %304 = vrot.lane.b32.xlu0 %v196, 127
    %v305 = vpop.permute.xlu0 %304
    %306 = vrot.lane.b32.xlu0 %v197, 127
    %v307 = vpop.permute.xlu0 %306
    %308 = vrot.lane.b32.xlu0 %v198, 127
    %v309 = vpop.permute.xlu0 %308
    %310 = vrot.lane.b32.xlu0 %v199, 127
    %v311 = vpop.permute.xlu0 %310
    %312 = vrot.lane.b32.xlu0 %v200, 127
    %v313 = vpop.permute.xlu0 %312
    %314 = vrot.lane.b32.xlu0 %v201, 127
    %v315 = vpop.permute.xlu0 %314
    %316 = vrot.lane.b32.xlu0 %v202, 127
    %v317 = vpop.permute.xlu0 %316
    %318 = vrot.lane.b32.xlu0 %v203, 127
    %v319 = vpop.permute.xlu0 %318
    %320 = vrot.lane.b32.xlu0 %v204, 127
    %v321 = vpop.permute.xlu0 %320
    %322 = vrot.lane.b32.xlu0 %v205, 127
    %v323 = vpop.permute.xlu0 %322
    %324 = vrot.lane.b32.xlu0 %v206, 127
    %v325 = vpop.permute.xlu0 %324
    %v326 = vsel %vm293, %v295, %v191
    %v327 = vsel %vm293, %v297, %v192
    %v328 = vsel %vm293, %v299, %v193
    %v329 = vsel %vm293, %v301, %v194
    %v330 = vsel %vm293, %v303, %v195
    %v331 = vsel %vm293, %v305, %v196
    %v332 = vsel %vm293, %v307, %v197
    %v333 = vsel %vm293, %v309, %v198
    %v334 = vsel %vm293, %v311, %v199
    %v335 = vsel %vm293, %v313, %v200
    %v336 = vsel %vm293, %v315, %v201
    %v337 = vsel %vm293, %v317, %v202
    %v338 = vsel %vm293, %v319, %v203
    %v339 = vsel %vm293, %v321, %v204
    %v340 = vsel %vm293, %v323, %v205
    %v341 = vsel %vm293, %v325, %v206
    %v342 = vlaneseq
    %v343 = vshrl.u32 %v342, 7
    %v344 = vsub.s32 1, %v343
    %v345 = vrot.slane %v207, %v344
    %v346 = vmul.f32 %v326, %v345
    %v347 = vmul.f32 %v327, %v345
    %v348 = vmul.f32 %v328, %v345
    %v349 = vmul.f32 %v329, %v345
    %v350 = vmul.f32 %v330, %v345
    %v351 = vmul.f32 %v331, %v345
    %v352 = vmul.f32 %v332, %v345
    %v353 = vmul.f32 %v333, %v345
    %v354 = vmul.f32 %v334, %v345
    %v355 = vmul.f32 %v335, %v345
    %v356 = vmul.f32 %v336, %v345
    %v357 = vmul.f32 %v337, %v345
    %v358 = vmul.f32 %v338, %v345
    %v359 = vmul.f32 %v339, %v345
    %v360 = vmul.f32 %v340, %v345
    %v361 = vmul.f32 %v341, %v345
    %v362 = vadd.f32 %v277, %v346
    %v363 = vadd.f32 %v278, %v347
    %v364 = vadd.f32 %v279, %v348
    %v365 = vadd.f32 %v280, %v349
    %v366 = vadd.f32 %v281, %v350
    %v367 = vadd.f32 %v282, %v351
    %v368 = vadd.f32 %v283, %v352
    %v369 = vadd.f32 %v284, %v353
    %v370 = vadd.f32 %v285, %v354
    %v371 = vadd.f32 %v286, %v355
    %v372 = vadd.f32 %v287, %v356
    %v373 = vadd.f32 %v288, %v357
    %v374 = vadd.f32 %v289, %v358
    %v375 = vadd.f32 %v290, %v359
    %v376 = vadd.f32 %v291, %v360
    %v377 = vadd.f32 %v292, %v361
    %s378 = scalar_lea.vmem [#allocation2], 160
    %v379 = vld [vmem:[%s378] sm:$0xff]
    %v380 = vld [vmem:[%s378 + $0x8] sm:$0xff]
    %v381 = vld [vmem:[%s378 + $0x10] sm:$0xff]
    %v382 = vld [vmem:[%s378 + $0x18] sm:$0xff]
    %v383 = vld [vmem:[%s378 + $0x20] sm:$0xff]
    %v384 = vld [vmem:[%s378 + $0x28] sm:$0xff]
    %v385 = vld [vmem:[%s378 + $0x30] sm:$0xff]
    %v386 = vld [vmem:[%s378 + $0x38] sm:$0xff]
    %v387 = vld [vmem:[%s378 + $0x50] sm:$0xff]
    %v388 = vld [vmem:[%s378 + $0x58] sm:$0xff]
    %v389 = vld [vmem:[%s378 + $0x60] sm:$0xff]
    %v390 = vld [vmem:[%s378 + $0x68] sm:$0xff]
    %v391 = vld [vmem:[%s378 + $0x70] sm:$0xff]
    %v392 = vld [vmem:[%s378 + $0x78] sm:$0xff]
    %v393 = vld [vmem:[%s378 + $0x80] sm:$0xff]
    %v394 = vld [vmem:[%s378 + $0x88] sm:$0xff]
    %s395 = scalar_lea.vmem [#allocation6], 2
    %v396 = vld [vmem:[%s395] sm:$0x3]
    %397 = vrot.lane.b32.xlu0 %v379, 1
    %v398 = vpop.permute.xlu0 %397
    %399 = vrot.lane.b32.xlu0 %v380, 1
    %v400 = vpop.permute.xlu0 %399
    %401 = vrot.lane.b32.xlu0 %v381, 1
    %v402 = vpop.permute.xlu0 %401
    %403 = vrot.lane.b32.xlu0 %v382, 1
    %v404 = vpop.permute.xlu0 %403
    %405 = vrot.lane.b32.xlu0 %v383, 1
    %v406 = vpop.permute.xlu0 %405
    %407 = vrot.lane.b32.xlu0 %v384, 1
    %v408 = vpop.permute.xlu0 %407
    %409 = vrot.lane.b32.xlu0 %v385, 1
    %v410 = vpop.permute.xlu0 %409
    %411 = vrot.lane.b32.xlu0 %v386, 1
    %v412 = vpop.permute.xlu0 %411
    %413 = vrot.lane.b32.xlu0 %v387, 1
    %v414 = vpop.permute.xlu0 %413
    %415 = vrot.lane.b32.xlu0 %v388, 1
    %v416 = vpop.permute.xlu0 %415
    %417 = vrot.lane.b32.xlu0 %v389, 1
    %v418 = vpop.permute.xlu0 %417
    %419 = vrot.lane.b32.xlu0 %v390, 1
    %v420 = vpop.permute.xlu0 %419
    %421 = vrot.lane.b32.xlu0 %v391, 1
    %v422 = vpop.permute.xlu0 %421
    %423 = vrot.lane.b32.xlu0 %v392, 1
    %v424 = vpop.permute.xlu0 %423
    %425 = vrot.lane.b32.xlu0 %v393, 1
    %v426 = vpop.permute.xlu0 %425
    %427 = vrot.lane.b32.xlu0 %v394, 1
    %v428 = vpop.permute.xlu0 %427
    %v429 = vsel %vm208, %v398, %v379
    %v430 = vsel %vm208, %v400, %v380
    %v431 = vsel %vm208, %v402, %v381
    %v432 = vsel %vm208, %v404, %v382
    %v433 = vsel %vm208, %v406, %v383
    %v434 = vsel %vm208, %v408, %v384
    %v435 = vsel %vm208, %v410, %v385
    %v436 = vsel %vm208, %v412, %v386
    %v437 = vsel %vm208, %v414, %v387
    %v438 = vsel %vm208, %v416, %v388
    %v439 = vsel %vm208, %v418, %v389
    %v440 = vsel %vm208, %v420, %v390
    %v441 = vsel %vm208, %v422, %v391
    %v442 = vsel %vm208, %v424, %v392
    %v443 = vsel %vm208, %v426, %v393
    %v444 = vsel %vm208, %v428, %v394
    %v445 = vlaneseq
    %v446 = vshrl.u32 %v445, 7
    %v447 = vsub.s32 0, %v446
    %v448 = vrot.slane %v396, %v447
    %v449 = vmul.f32 %v429, %v448
    %v450 = vmul.f32 %v430, %v448
    %v451 = vmul.f32 %v431, %v448
    %v452 = vmul.f32 %v432, %v448
    %v453 = vmul.f32 %v433, %v448
    %v454 = vmul.f32 %v434, %v448
    %v455 = vmul.f32 %v435, %v448
    %v456 = vmul.f32 %v436, %v448
    %v457 = vmul.f32 %v437, %v448
    %v458 = vmul.f32 %v438, %v448
    %v459 = vmul.f32 %v439, %v448
    %v460 = vmul.f32 %v440, %v448
    %v461 = vmul.f32 %v441, %v448
    %v462 = vmul.f32 %v442, %v448
    %v463 = vmul.f32 %v443, %v448
    %v464 = vmul.f32 %v444, %v448
    %v465 = vadd.f32 %v362, %v449
    %v466 = vadd.f32 %v363, %v450
    %v467 = vadd.f32 %v364, %v451
    %v468 = vadd.f32 %v365, %v452
    %v469 = vadd.f32 %v366, %v453
    %v470 = vadd.f32 %v367, %v454
    %v471 = vadd.f32 %v368, %v455
    %v472 = vadd.f32 %v369, %v456
    %v473 = vadd.f32 %v370, %v457
    %v474 = vadd.f32 %v371, %v458
    %v475 = vadd.f32 %v372, %v459
    %v476 = vadd.f32 %v373, %v460
    %v477 = vadd.f32 %v374, %v461
    %v478 = vadd.f32 %v375, %v462
    %v479 = vadd.f32 %v376, %v463
    %v480 = vadd.f32 %v377, %v464
    %481 = vrot.lane.b32.xlu0 %v379, 127
    %v482 = vpop.permute.xlu0 %481
    %483 = vrot.lane.b32.xlu0 %v380, 127
    %v484 = vpop.permute.xlu0 %483
    %485 = vrot.lane.b32.xlu0 %v381, 127
    %v486 = vpop.permute.xlu0 %485
    %487 = vrot.lane.b32.xlu0 %v382, 127
    %v488 = vpop.permute.xlu0 %487
    %489 = vrot.lane.b32.xlu0 %v383, 127
    %v490 = vpop.permute.xlu0 %489
    %491 = vrot.lane.b32.xlu0 %v384, 127
    %v492 = vpop.permute.xlu0 %491
    %493 = vrot.lane.b32.xlu0 %v385, 127
    %v494 = vpop.permute.xlu0 %493
    %495 = vrot.lane.b32.xlu0 %v386, 127
    %v496 = vpop.permute.xlu0 %495
    %497 = vrot.lane.b32.xlu0 %v387, 127
    %v498 = vpop.permute.xlu0 %497
    %499 = vrot.lane.b32.xlu0 %v388, 127
    %v500 = vpop.permute.xlu0 %499
    %501 = vrot.lane.b32.xlu0 %v389, 127
    %v502 = vpop.permute.xlu0 %501
    %503 = vrot.lane.b32.xlu0 %v390, 127
    %v504 = vpop.permute.xlu0 %503
    %505 = vrot.lane.b32.xlu0 %v391, 127
    %v506 = vpop.permute.xlu0 %505
    %507 = vrot.lane.b32.xlu0 %v392, 127
    %v508 = vpop.permute.xlu0 %507
    %509 = vrot.lane.b32.xlu0 %v393, 127
    %v510 = vpop.permute.xlu0 %509
    %511 = vrot.lane.b32.xlu0 %v394, 127
    %v512 = vpop.permute.xlu0 %511
    %v513 = vsel %vm293, %v482, %v379
    %v514 = vsel %vm293, %v484, %v380
    %v515 = vsel %vm293, %v486, %v381
    %v516 = vsel %vm293, %v488, %v382
    %v517 = vsel %vm293, %v490, %v383
    %v518 = vsel %vm293, %v492, %v384
    %v519 = vsel %vm293, %v494, %v385
    %v520 = vsel %vm293, %v496, %v386
    %v521 = vsel %vm293, %v498, %v387
    %v522 = vsel %vm293, %v500, %v388
    %v523 = vsel %vm293, %v502, %v389
    %v524 = vsel %vm293, %v504, %v390
    %v525 = vsel %vm293, %v506, %v391
    %v526 = vsel %vm293, %v508, %v392
    %v527 = vsel %vm293, %v510, %v393
    %v528 = vsel %vm293, %v512, %v394
    %v529 = vlaneseq
    %v530 = vshrl.u32 %v529, 7
    %v531 = vsub.s32 1, %v530
    %v532 = vrot.slane %v396, %v531
    %v533 = vmul.f32 %v513, %v532
    %v534 = vmul.f32 %v514, %v532
    %v535 = vmul.f32 %v515, %v532
    %v536 = vmul.f32 %v516, %v532
    %v537 = vmul.f32 %v517, %v532
    %v538 = vmul.f32 %v518, %v532
    %v539 = vmul.f32 %v519, %v532
    %v540 = vmul.f32 %v520, %v532
    %v541 = vmul.f32 %v521, %v532
    %v542 = vmul.f32 %v522, %v532
    %v543 = vmul.f32 %v523, %v532
    %v544 = vmul.f32 %v524, %v532
    %v545 = vmul.f32 %v525, %v532
    %v546 = vmul.f32 %v526, %v532
    %v547 = vmul.f32 %v527, %v532
    %v548 = vmul.f32 %v528, %v532
    %v549 = vadd.f32 %v465, %v533
    %v550 = vadd.f32 %v466, %v534
    %v551 = vadd.f32 %v467, %v535
    %v552 = vadd.f32 %v468, %v536
    %v553 = vadd.f32 %v469, %v537
    %v554 = vadd.f32 %v470, %v538
    %v555 = vadd.f32 %v471, %v539
    %v556 = vadd.f32 %v472, %v540
    %v557 = vadd.f32 %v473, %v541
    %v558 = vadd.f32 %v474, %v542
    %v559 = vadd.f32 %v475, %v543
    %v560 = vadd.f32 %v476, %v544
    %v561 = vadd.f32 %v477, %v545
    %v562 = vadd.f32 %v478, %v546
    %v563 = vadd.f32 %v479, %v547
    %v564 = vadd.f32 %v480, %v548
    %s565 = scalar_lea.vmem [#allocation2], 320
    %v566 = vld [vmem:[%s565] sm:$0xff]
    %v567 = vld [vmem:[%s565 + $0x8] sm:$0xff]
    %v568 = vld [vmem:[%s565 + $0x10] sm:$0xff]
    %v569 = vld [vmem:[%s565 + $0x18] sm:$0xff]
    %v570 = vld [vmem:[%s565 + $0x20] sm:$0xff]
    %v571 = vld [vmem:[%s565 + $0x28] sm:$0xff]
    %v572 = vld [vmem:[%s565 + $0x30] sm:$0xff]
    %v573 = vld [vmem:[%s565 + $0x38] sm:$0xff]
    %v574 = vld [vmem:[%s565 + $0x50] sm:$0xff]
    %v575 = vld [vmem:[%s565 + $0x58] sm:$0xff]
    %v576 = vld [vmem:[%s565 + $0x60] sm:$0xff]
    %v577 = vld [vmem:[%s565 + $0x68] sm:$0xff]
    %v578 = vld [vmem:[%s565 + $0x70] sm:$0xff]
    %v579 = vld [vmem:[%s565 + $0x78] sm:$0xff]
    %v580 = vld [vmem:[%s565 + $0x80] sm:$0xff]
    %v581 = vld [vmem:[%s565 + $0x88] sm:$0xff]
    %s582 = scalar_lea.vmem [#allocation6], 4
    %v583 = vld [vmem:[%s582] sm:$0x3]
    %584 = vrot.lane.b32.xlu0 %v566, 1
    %v585 = vpop.permute.xlu0 %584
    %586 = vrot.lane.b32.xlu0 %v567, 1
    %v587 = vpop.permute.xlu0 %586
    %588 = vrot.lane.b32.xlu0 %v568, 1
    %v589 = vpop.permute.xlu0 %588
    %590 = vrot.lane.b32.xlu0 %v569, 1
    %v591 = vpop.permute.xlu0 %590
    %592 = vrot.lane.b32.xlu0 %v570, 1
    %v593 = vpop.permute.xlu0 %592
    %594 = vrot.lane.b32.xlu0 %v571, 1
    %v595 = vpop.permute.xlu0 %594
    %596 = vrot.lane.b32.xlu0 %v572, 1
    %v597 = vpop.permute.xlu0 %596
    %598 = vrot.lane.b32.xlu0 %v573, 1
    %v599 = vpop.permute.xlu0 %598
    %600 = vrot.lane.b32.xlu0 %v574, 1
    %v601 = vpop.permute.xlu0 %600
    %602 = vrot.lane.b32.xlu0 %v575, 1
    %v603 = vpop.permute.xlu0 %602
    %604 = vrot.lane.b32.xlu0 %v576, 1
    %v605 = vpop.permute.xlu0 %604
    %606 = vrot.lane.b32.xlu0 %v577, 1
    %v607 = vpop.permute.xlu0 %606
    %608 = vrot.lane.b32.xlu0 %v578, 1
    %v609 = vpop.permute.xlu0 %608
    %610 = vrot.lane.b32.xlu0 %v579, 1
    %v611 = vpop.permute.xlu0 %610
    %612 = vrot.lane.b32.xlu0 %v580, 1
    %v613 = vpop.permute.xlu0 %612
    %614 = vrot.lane.b32.xlu0 %v581, 1
    %v615 = vpop.permute.xlu0 %614
    %v616 = vsel %vm208, %v585, %v566
    %v617 = vsel %vm208, %v587, %v567
    %v618 = vsel %vm208, %v589, %v568
    %v619 = vsel %vm208, %v591, %v569
    %v620 = vsel %vm208, %v593, %v570
    %v621 = vsel %vm208, %v595, %v571
    %v622 = vsel %vm208, %v597, %v572
    %v623 = vsel %vm208, %v599, %v573
    %v624 = vsel %vm208, %v601, %v574
    %v625 = vsel %vm208, %v603, %v575
    %v626 = vsel %vm208, %v605, %v576
    %v627 = vsel %vm208, %v607, %v577
    %v628 = vsel %vm208, %v609, %v578
    %v629 = vsel %vm208, %v611, %v579
    %v630 = vsel %vm208, %v613, %v580
    %v631 = vsel %vm208, %v615, %v581
    %v632 = vlaneseq
    %v633 = vshrl.u32 %v632, 7
    %v634 = vsub.s32 0, %v633
    %v635 = vrot.slane %v583, %v634
    %v636 = vmul.f32 %v616, %v635
    %v637 = vmul.f32 %v617, %v635
    %v638 = vmul.f32 %v618, %v635
    %v639 = vmul.f32 %v619, %v635
    %v640 = vmul.f32 %v620, %v635
    %v641 = vmul.f32 %v621, %v635
    %v642 = vmul.f32 %v622, %v635
    %v643 = vmul.f32 %v623, %v635
    %v644 = vmul.f32 %v624, %v635
    %v645 = vmul.f32 %v625, %v635
    %v646 = vmul.f32 %v626, %v635
    %v647 = vmul.f32 %v627, %v635
    %v648 = vmul.f32 %v628, %v635
    %v649 = vmul.f32 %v629, %v635
    %v650 = vmul.f32 %v630, %v635
    %v651 = vmul.f32 %v631, %v635
    %v652 = vadd.f32 %v549, %v636
    %v653 = vadd.f32 %v550, %v637
    %v654 = vadd.f32 %v551, %v638
    %v655 = vadd.f32 %v552, %v639
    %v656 = vadd.f32 %v553, %v640
    %v657 = vadd.f32 %v554, %v641
    %v658 = vadd.f32 %v555, %v642
    %v659 = vadd.f32 %v556, %v643
    %v660 = vadd.f32 %v557, %v644
    %v661 = vadd.f32 %v558, %v645
    %v662 = vadd.f32 %v559, %v646
    %v663 = vadd.f32 %v560, %v647
    %v664 = vadd.f32 %v561, %v648
    %v665 = vadd.f32 %v562, %v649
    %v666 = vadd.f32 %v563, %v650
    %v667 = vadd.f32 %v564, %v651
    %668 = vrot.lane.b32.xlu0 %v566, 127
    %v669 = vpop.permute.xlu0 %668
    %670 = vrot.lane.b32.xlu0 %v567, 127
    %v671 = vpop.permute.xlu0 %670
    %672 = vrot.lane.b32.xlu0 %v568, 127
    %v673 = vpop.permute.xlu0 %672
    %674 = vrot.lane.b32.xlu0 %v569, 127
    %v675 = vpop.permute.xlu0 %674
    %676 = vrot.lane.b32.xlu0 %v570, 127
    %v677 = vpop.permute.xlu0 %676
    %678 = vrot.lane.b32.xlu0 %v571, 127
    %v679 = vpop.permute.xlu0 %678
    %680 = vrot.lane.b32.xlu0 %v572, 127
    %v681 = vpop.permute.xlu0 %680
    %682 = vrot.lane.b32.xlu0 %v573, 127
    %v683 = vpop.permute.xlu0 %682
    %684 = vrot.lane.b32.xlu0 %v574, 127
    %v685 = vpop.permute.xlu0 %684
    %686 = vrot.lane.b32.xlu0 %v575, 127
    %v687 = vpop.permute.xlu0 %686
    %688 = vrot.lane.b32.xlu0 %v576, 127
    %v689 = vpop.permute.xlu0 %688
    %690 = vrot.lane.b32.xlu0 %v577, 127
    %v691 = vpop.permute.xlu0 %690
    %692 = vrot.lane.b32.xlu0 %v578, 127
    %v693 = vpop.permute.xlu0 %692
    %694 = vrot.lane.b32.xlu0 %v579, 127
    %v695 = vpop.permute.xlu0 %694
    %696 = vrot.lane.b32.xlu0 %v580, 127
    %v697 = vpop.permute.xlu0 %696
    %698 = vrot.lane.b32.xlu0 %v581, 127
    %v699 = vpop.permute.xlu0 %698
    %v700 = vsel %vm293, %v669, %v566
    %v701 = vsel %vm293, %v671, %v567
    %v702 = vsel %vm293, %v673, %v568
    %v703 = vsel %vm293, %v675, %v569
    %v704 = vsel %vm293, %v677, %v570
    %v705 = vsel %vm293, %v679, %v571
    %v706 = vsel %vm293, %v681, %v572
    %v707 = vsel %vm293, %v683, %v573
    %v708 = vsel %vm293, %v685, %v574
    %v709 = vsel %vm293, %v687, %v575
    %v710 = vsel %vm293, %v689, %v576
    %v711 = vsel %vm293, %v691, %v577
    %v712 = vsel %vm293, %v693, %v578
    %v713 = vsel %vm293, %v695, %v579
    %v714 = vsel %vm293, %v697, %v580
    %v715 = vsel %vm293, %v699, %v581
    %v716 = vlaneseq
    %v717 = vshrl.u32 %v716, 7
    %v718 = vsub.s32 1, %v717
    %v719 = vrot.slane %v583, %v718
    %v720 = vmul.f32 %v700, %v719
    %v721 = vmul.f32 %v701, %v719
    %v722 = vmul.f32 %v702, %v719
    %v723 = vmul.f32 %v703, %v719
    %v724 = vmul.f32 %v704, %v719
    %v725 = vmul.f32 %v705, %v719
    %v726 = vmul.f32 %v706, %v719
    %v727 = vmul.f32 %v707, %v719
    %v728 = vmul.f32 %v708, %v719
    %v729 = vmul.f32 %v709, %v719
    %v730 = vmul.f32 %v710, %v719
    %v731 = vmul.f32 %v711, %v719
    %v732 = vmul.f32 %v712, %v719
    %v733 = vmul.f32 %v713, %v719
    %v734 = vmul.f32 %v714, %v719
    %v735 = vmul.f32 %v715, %v719
    %v736 = vadd.f32 %v652, %v720
    %v737 = vadd.f32 %v653, %v721
    %v738 = vadd.f32 %v654, %v722
    %v739 = vadd.f32 %v655, %v723
    %v740 = vadd.f32 %v656, %v724
    %v741 = vadd.f32 %v657, %v725
    %v742 = vadd.f32 %v658, %v726
    %v743 = vadd.f32 %v659, %v727
    %v744 = vadd.f32 %v660, %v728
    %v745 = vadd.f32 %v661, %v729
    %v746 = vadd.f32 %v662, %v730
    %v747 = vadd.f32 %v663, %v731
    %v748 = vadd.f32 %v664, %v732
    %v749 = vadd.f32 %v665, %v733
    %v750 = vadd.f32 %v666, %v734
    %v751 = vadd.f32 %v667, %v735
    %v752 = vld [vmem:[%s119] sm:$0xff]
    %v753 = vld [vmem:[%s119 + $0x8] sm:$0xff]
    %v754 = vld [vmem:[%s119 + $0x10] sm:$0xff]
    %v755 = vld [vmem:[%s119 + $0x18] sm:$0xff]
    %v756 = vld [vmem:[%s119 + $0x20] sm:$0xff]
    %v757 = vld [vmem:[%s119 + $0x28] sm:$0xff]
    %v758 = vld [vmem:[%s119 + $0x30] sm:$0xff]
    %v759 = vld [vmem:[%s119 + $0x38] sm:$0xff]
    %v760 = vld [vmem:[%s119 + $0x50] sm:$0xff]
    %v761 = vld [vmem:[%s119 + $0x58] sm:$0xff]
    %v762 = vld [vmem:[%s119 + $0x60] sm:$0xff]
    %v763 = vld [vmem:[%s119 + $0x68] sm:$0xff]
    %v764 = vld [vmem:[%s119 + $0x70] sm:$0xff]
    %v765 = vld [vmem:[%s119 + $0x78] sm:$0xff]
    %v766 = vld [vmem:[%s119 + $0x80] sm:$0xff]
    %v767 = vld [vmem:[%s119 + $0x88] sm:$0xff]
    %s768 = scalar_lea.vmem [#allocation6], 6
    %v769 = vld [vmem:[%s768] sm:$0x3]
    %770 = vrot.lane.b32.xlu0 %v752, 1
    %v771 = vpop.permute.xlu0 %770
    %772 = vrot.lane.b32.xlu0 %v753, 1
    %v773 = vpop.permute.xlu0 %772
    %774 = vrot.lane.b32.xlu0 %v754, 1
    %v775 = vpop.permute.xlu0 %774
    %776 = vrot.lane.b32.xlu0 %v755, 1
    %v777 = vpop.permute.xlu0 %776
    %778 = vrot.lane.b32.xlu0 %v756, 1
    %v779 = vpop.permute.xlu0 %778
    %780 = vrot.lane.b32.xlu0 %v757, 1
    %v781 = vpop.permute.xlu0 %780
    %782 = vrot.lane.b32.xlu0 %v758, 1
    %v783 = vpop.permute.xlu0 %782
    %784 = vrot.lane.b32.xlu0 %v759, 1
    %v785 = vpop.permute.xlu0 %784
    %786 = vrot.lane.b32.xlu0 %v760, 1
    %v787 = vpop.permute.xlu0 %786
    %788 = vrot.lane.b32.xlu0 %v761, 1
    %v789 = vpop.permute.xlu0 %788
    %790 = vrot.lane.b32.xlu0 %v762, 1
    %v791 = vpop.permute.xlu0 %790
    %792 = vrot.lane.b32.xlu0 %v763, 1
    %v793 = vpop.permute.xlu0 %792
    %794 = vrot.lane.b32.xlu0 %v764, 1
    %v795 = vpop.permute.xlu0 %794
    %796 = vrot.lane.b32.xlu0 %v765, 1
    %v797 = vpop.permute.xlu0 %796
    %798 = vrot.lane.b32.xlu0 %v766, 1
    %v799 = vpop.permute.xlu0 %798
    %800 = vrot.lane.b32.xlu0 %v767, 1
    %v801 = vpop.permute.xlu0 %800
    %v802 = vsel %vm208, %v771, %v752
    %v803 = vsel %vm208, %v773, %v753
    %v804 = vsel %vm208, %v775, %v754
    %v805 = vsel %vm208, %v777, %v755
    %v806 = vsel %vm208, %v779, %v756
    %v807 = vsel %vm208, %v781, %v757
    %v808 = vsel %vm208, %v783, %v758
    %v809 = vsel %vm208, %v785, %v759
    %v810 = vsel %vm208, %v787, %v760
    %v811 = vsel %vm208, %v789, %v761
    %v812 = vsel %vm208, %v791, %v762
    %v813 = vsel %vm208, %v793, %v763
    %v814 = vsel %vm208, %v795, %v764
    %v815 = vsel %vm208, %v797, %v765
    %v816 = vsel %vm208, %v799, %v766
    %v817 = vsel %vm208, %v801, %v767
    %v818 = vlaneseq
    %v819 = vshrl.u32 %v818, 7
    %v820 = vsub.s32 0, %v819
    %v821 = vrot.slane %v769, %v820
    %v822 = vmul.f32 %v802, %v821
    %v823 = vmul.f32 %v803, %v821
    %v824 = vmul.f32 %v804, %v821
    %v825 = vmul.f32 %v805, %v821
    %v826 = vmul.f32 %v806, %v821
    %v827 = vmul.f32 %v807, %v821
    %v828 = vmul.f32 %v808, %v821
    %v829 = vmul.f32 %v809, %v821
    %v830 = vmul.f32 %v810, %v821
    %v831 = vmul.f32 %v811, %v821
    %v832 = vmul.f32 %v812, %v821
    %v833 = vmul.f32 %v813, %v821
    %v834 = vmul.f32 %v814, %v821
    %v835 = vmul.f32 %v815, %v821
    %v836 = vmul.f32 %v816, %v821
    %v837 = vmul.f32 %v817, %v821
    %v838 = vadd.f32 %v736, %v822
    %v839 = vadd.f32 %v737, %v823
    %v840 = vadd.f32 %v738, %v824
    %v841 = vadd.f32 %v739, %v825
    %v842 = vadd.f32 %v740, %v826
    %v843 = vadd.f32 %v741, %v827
    %v844 = vadd.f32 %v742, %v828
    %v845 = vadd.f32 %v743, %v829
    %v846 = vadd.f32 %v744, %v830
    %v847 = vadd.f32 %v745, %v831
    %v848 = vadd.f32 %v746, %v832
    %v849 = vadd.f32 %v747, %v833
    %v850 = vadd.f32 %v748, %v834
    %v851 = vadd.f32 %v749, %v835
    %v852 = vadd.f32 %v750, %v836
    %v853 = vadd.f32 %v751, %v837
    %854 = vrot.lane.b32.xlu0 %v752, 127
    %v855 = vpop.permute.xlu0 %854
    %856 = vrot.lane.b32.xlu0 %v753, 127
    %v857 = vpop.permute.xlu0 %856
    %858 = vrot.lane.b32.xlu0 %v754, 127
    %v859 = vpop.permute.xlu0 %858
    %860 = vrot.lane.b32.xlu0 %v755, 127
    %v861 = vpop.permute.xlu0 %860
    %862 = vrot.lane.b32.xlu0 %v756, 127
    %v863 = vpop.permute.xlu0 %862
    %864 = vrot.lane.b32.xlu0 %v757, 127
    %v865 = vpop.permute.xlu0 %864
    %866 = vrot.lane.b32.xlu0 %v758, 127
    %v867 = vpop.permute.xlu0 %866
    %868 = vrot.lane.b32.xlu0 %v759, 127
    %v869 = vpop.permute.xlu0 %868
    %870 = vrot.lane.b32.xlu0 %v760, 127
    %v871 = vpop.permute.xlu0 %870
    %872 = vrot.lane.b32.xlu0 %v761, 127
    %v873 = vpop.permute.xlu0 %872
    %874 = vrot.lane.b32.xlu0 %v762, 127
    %v875 = vpop.permute.xlu0 %874
    %876 = vrot.lane.b32.xlu0 %v763, 127
    %v877 = vpop.permute.xlu0 %876
    %878 = vrot.lane.b32.xlu0 %v764, 127
    %v879 = vpop.permute.xlu0 %878
    %880 = vrot.lane.b32.xlu0 %v765, 127
    %v881 = vpop.permute.xlu0 %880
    %882 = vrot.lane.b32.xlu0 %v766, 127
    %v883 = vpop.permute.xlu0 %882
    %884 = vrot.lane.b32.xlu0 %v767, 127
    %v885 = vpop.permute.xlu0 %884
    %v886 = vsel %vm293, %v855, %v752
    %v887 = vsel %vm293, %v857, %v753
    %v888 = vsel %vm293, %v859, %v754
    %v889 = vsel %vm293, %v861, %v755
    %v890 = vsel %vm293, %v863, %v756
    %v891 = vsel %vm293, %v865, %v757
    %v892 = vsel %vm293, %v867, %v758
    %v893 = vsel %vm293, %v869, %v759
    %v894 = vsel %vm293, %v871, %v760
    %v895 = vsel %vm293, %v873, %v761
    %v896 = vsel %vm293, %v875, %v762
    %v897 = vsel %vm293, %v877, %v763
    %v898 = vsel %vm293, %v879, %v764
    %v899 = vsel %vm293, %v881, %v765
    %v900 = vsel %vm293, %v883, %v766
    %v901 = vsel %vm293, %v885, %v767
    %v902 = vlaneseq
    %v903 = vshrl.u32 %v902, 7
    %v904 = vsub.s32 1, %v903
    %v905 = vrot.slane %v769, %v904
    %v906 = vmul.f32 %v886, %v905
    %v907 = vmul.f32 %v887, %v905
    %v908 = vmul.f32 %v888, %v905
    %v909 = vmul.f32 %v889, %v905
    %v910 = vmul.f32 %v890, %v905
    %v911 = vmul.f32 %v891, %v905
    %v912 = vmul.f32 %v892, %v905
    %v913 = vmul.f32 %v893, %v905
    %v914 = vmul.f32 %v894, %v905
    %v915 = vmul.f32 %v895, %v905
    %v916 = vmul.f32 %v896, %v905
    %v917 = vmul.f32 %v897, %v905
    %v918 = vmul.f32 %v898, %v905
    %v919 = vmul.f32 %v899, %v905
    %v920 = vmul.f32 %v900, %v905
    %v921 = vmul.f32 %v901, %v905
    %v922 = vadd.f32 %v838, %v906
    %v923 = vadd.f32 %v839, %v907
    %v924 = vadd.f32 %v840, %v908
    %v925 = vadd.f32 %v841, %v909
    %v926 = vadd.f32 %v842, %v910
    %v927 = vadd.f32 %v843, %v911
    %v928 = vadd.f32 %v844, %v912
    %v929 = vadd.f32 %v845, %v913
    %v930 = vadd.f32 %v846, %v914
    %v931 = vadd.f32 %v847, %v915
    %v932 = vadd.f32 %v848, %v916
    %v933 = vadd.f32 %v849, %v917
    %v934 = vadd.f32 %v850, %v918
    %v935 = vadd.f32 %v851, %v919
    %v936 = vadd.f32 %v852, %v920
    %v937 = vadd.f32 %v853, %v921
    %v938 = vld [vmem:[%s136] sm:$0xff]
    %v939 = vld [vmem:[%s136 + $0x8] sm:$0xff]
    %v940 = vld [vmem:[%s136 + $0x10] sm:$0xff]
    %v941 = vld [vmem:[%s136 + $0x18] sm:$0xff]
    %v942 = vld [vmem:[%s136 + $0x20] sm:$0xff]
    %v943 = vld [vmem:[%s136 + $0x28] sm:$0xff]
    %v944 = vld [vmem:[%s136 + $0x30] sm:$0xff]
    %v945 = vld [vmem:[%s136 + $0x38] sm:$0xff]
    %v946 = vld [vmem:[%s136 + $0x50] sm:$0xff]
    %v947 = vld [vmem:[%s136 + $0x58] sm:$0xff]
    %v948 = vld [vmem:[%s136 + $0x60] sm:$0xff]
    %v949 = vld [vmem:[%s136 + $0x68] sm:$0xff]
    %v950 = vld [vmem:[%s136 + $0x70] sm:$0xff]
    %v951 = vld [vmem:[%s136 + $0x78] sm:$0xff]
    %v952 = vld [vmem:[%s136 + $0x80] sm:$0xff]
    %v953 = vld [vmem:[%s136 + $0x88] sm:$0xff]
    %s954 = scalar_lea.vmem [#allocation6], 8
    %v955 = vld [vmem:[%s954] sm:$0x3]
    %956 = vrot.lane.b32.xlu0 %v938, 1
    %v957 = vpop.permute.xlu0 %956
    %958 = vrot.lane.b32.xlu0 %v939, 1
    %v959 = vpop.permute.xlu0 %958
    %960 = vrot.lane.b32.xlu0 %v940, 1
    %v961 = vpop.permute.xlu0 %960
    %962 = vrot.lane.b32.xlu0 %v941, 1
    %v963 = vpop.permute.xlu0 %962
    %964 = vrot.lane.b32.xlu0 %v942, 1
    %v965 = vpop.permute.xlu0 %964
    %966 = vrot.lane.b32.xlu0 %v943, 1
    %v967 = vpop.permute.xlu0 %966
    %968 = vrot.lane.b32.xlu0 %v944, 1
    %v969 = vpop.permute.xlu0 %968
    %970 = vrot.lane.b32.xlu0 %v945, 1
    %v971 = vpop.permute.xlu0 %970
    %972 = vrot.lane.b32.xlu0 %v946, 1
    %v973 = vpop.permute.xlu0 %972
    %974 = vrot.lane.b32.xlu0 %v947, 1
    %v975 = vpop.permute.xlu0 %974
    %976 = vrot.lane.b32.xlu0 %v948, 1
    %v977 = vpop.permute.xlu0 %976
    %978 = vrot.lane.b32.xlu0 %v949, 1
    %v979 = vpop.permute.xlu0 %978
    %980 = vrot.lane.b32.xlu0 %v950, 1
    %v981 = vpop.permute.xlu0 %980
    %982 = vrot.lane.b32.xlu0 %v951, 1
    %v983 = vpop.permute.xlu0 %982
    %984 = vrot.lane.b32.xlu0 %v952, 1
    %v985 = vpop.permute.xlu0 %984
    %986 = vrot.lane.b32.xlu0 %v953, 1
    %v987 = vpop.permute.xlu0 %986
    %v988 = vsel %vm208, %v957, %v938
    %v989 = vsel %vm208, %v959, %v939
    %v990 = vsel %vm208, %v961, %v940
    %v991 = vsel %vm208, %v963, %v941
    %v992 = vsel %vm208, %v965, %v942
    %v993 = vsel %vm208, %v967, %v943
    %v994 = vsel %vm208, %v969, %v944
    %v995 = vsel %vm208, %v971, %v945
    %v996 = vsel %vm208, %v973, %v946
    %v997 = vsel %vm208, %v975, %v947
    %v998 = vsel %vm208, %v977, %v948
    %v999 = vsel %vm208, %v979, %v949
    %v1000 = vsel %vm208, %v981, %v950
    %v1001 = vsel %vm208, %v983, %v951
    %v1002 = vsel %vm208, %v985, %v952
    %v1003 = vsel %vm208, %v987, %v953
    %v1004 = vlaneseq
    %v1005 = vshrl.u32 %v1004, 7
    %v1006 = vsub.s32 0, %v1005
    %v1007 = vrot.slane %v955, %v1006
    %v1008 = vmul.f32 %v988, %v1007
    %v1009 = vmul.f32 %v989, %v1007
    %v1010 = vmul.f32 %v990, %v1007
    %v1011 = vmul.f32 %v991, %v1007
    %v1012 = vmul.f32 %v992, %v1007
    %v1013 = vmul.f32 %v993, %v1007
    %v1014 = vmul.f32 %v994, %v1007
    %v1015 = vmul.f32 %v995, %v1007
    %v1016 = vmul.f32 %v996, %v1007
    %v1017 = vmul.f32 %v997, %v1007
    %v1018 = vmul.f32 %v998, %v1007
    %v1019 = vmul.f32 %v999, %v1007
    %v1020 = vmul.f32 %v1000, %v1007
    %v1021 = vmul.f32 %v1001, %v1007
    %v1022 = vmul.f32 %v1002, %v1007
    %v1023 = vmul.f32 %v1003, %v1007
    %v1024 = vadd.f32 %v922, %v1008
    %v1025 = vadd.f32 %v923, %v1009
    %v1026 = vadd.f32 %v924, %v1010
    %v1027 = vadd.f32 %v925, %v1011
    %v1028 = vadd.f32 %v926, %v1012
    %v1029 = vadd.f32 %v927, %v1013
    %v1030 = vadd.f32 %v928, %v1014
    %v1031 = vadd.f32 %v929, %v1015
    %v1032 = vadd.f32 %v930, %v1016
    %v1033 = vadd.f32 %v931, %v1017
    %v1034 = vadd.f32 %v932, %v1018
    %v1035 = vadd.f32 %v933, %v1019
    %v1036 = vadd.f32 %v934, %v1020
    %v1037 = vadd.f32 %v935, %v1021
    %v1038 = vadd.f32 %v936, %v1022
    %v1039 = vadd.f32 %v937, %v1023
    %1040 = vrot.lane.b32.xlu0 %v938, 127
    %v1041 = vpop.permute.xlu0 %1040
    %1042 = vrot.lane.b32.xlu0 %v939, 127
    %v1043 = vpop.permute.xlu0 %1042
    %1044 = vrot.lane.b32.xlu0 %v940, 127
    %v1045 = vpop.permute.xlu0 %1044
    %1046 = vrot.lane.b32.xlu0 %v941, 127
    %v1047 = vpop.permute.xlu0 %1046
    %1048 = vrot.lane.b32.xlu0 %v942, 127
    %v1049 = vpop.permute.xlu0 %1048
    %1050 = vrot.lane.b32.xlu0 %v943, 127
    %v1051 = vpop.permute.xlu0 %1050
    %1052 = vrot.lane.b32.xlu0 %v944, 127
    %v1053 = vpop.permute.xlu0 %1052
    %1054 = vrot.lane.b32.xlu0 %v945, 127
    %v1055 = vpop.permute.xlu0 %1054
    %1056 = vrot.lane.b32.xlu0 %v946, 127
    %v1057 = vpop.permute.xlu0 %1056
    %1058 = vrot.lane.b32.xlu0 %v947, 127
    %v1059 = vpop.permute.xlu0 %1058
    %1060 = vrot.lane.b32.xlu0 %v948, 127
    %v1061 = vpop.permute.xlu0 %1060
    %1062 = vrot.lane.b32.xlu0 %v949, 127
    %v1063 = vpop.permute.xlu0 %1062
    %1064 = vrot.lane.b32.xlu0 %v950, 127
    %v1065 = vpop.permute.xlu0 %1064
    %1066 = vrot.lane.b32.xlu0 %v951, 127
    %v1067 = vpop.permute.xlu0 %1066
    %1068 = vrot.lane.b32.xlu0 %v952, 127
    %v1069 = vpop.permute.xlu0 %1068
    %1070 = vrot.lane.b32.xlu0 %v953, 127
    %v1071 = vpop.permute.xlu0 %1070
    %v1072 = vsel %vm293, %v1041, %v938
    %v1073 = vsel %vm293, %v1043, %v939
    %v1074 = vsel %vm293, %v1045, %v940
    %v1075 = vsel %vm293, %v1047, %v941
    %v1076 = vsel %vm293, %v1049, %v942
    %v1077 = vsel %vm293, %v1051, %v943
    %v1078 = vsel %vm293, %v1053, %v944
    %v1079 = vsel %vm293, %v1055, %v945
    %v1080 = vsel %vm293, %v1057, %v946
    %v1081 = vsel %vm293, %v1059, %v947
    %v1082 = vsel %vm293, %v1061, %v948
    %v1083 = vsel %vm293, %v1063, %v949
    %v1084 = vsel %vm293, %v1065, %v950
    %v1085 = vsel %vm293, %v1067, %v951
    %v1086 = vsel %vm293, %v1069, %v952
    %v1087 = vsel %vm293, %v1071, %v953
    %v1088 = vlaneseq
    %v1089 = vshrl.u32 %v1088, 7
    %v1090 = vsub.s32 1, %v1089
    %v1091 = vrot.slane %v955, %v1090
    %v1092 = vmul.f32 %v1072, %v1091
    %v1093 = vmul.f32 %v1073, %v1091
    %v1094 = vmul.f32 %v1074, %v1091
    %v1095 = vmul.f32 %v1075, %v1091
    %v1096 = vmul.f32 %v1076, %v1091
    %v1097 = vmul.f32 %v1077, %v1091
    %v1098 = vmul.f32 %v1078, %v1091
    %v1099 = vmul.f32 %v1079, %v1091
    %v1100 = vmul.f32 %v1080, %v1091
    %v1101 = vmul.f32 %v1081, %v1091
    %v1102 = vmul.f32 %v1082, %v1091
    %v1103 = vmul.f32 %v1083, %v1091
    %v1104 = vmul.f32 %v1084, %v1091
    %v1105 = vmul.f32 %v1085, %v1091
    %v1106 = vmul.f32 %v1086, %v1091
    %v1107 = vmul.f32 %v1087, %v1091
    %v1108 = vadd.f32 %v1024, %v1092
    %v1109 = vadd.f32 %v1025, %v1093
    %v1110 = vadd.f32 %v1026, %v1094
    %v1111 = vadd.f32 %v1027, %v1095
    %v1112 = vadd.f32 %v1028, %v1096
    %v1113 = vadd.f32 %v1029, %v1097
    %v1114 = vadd.f32 %v1030, %v1098
    %v1115 = vadd.f32 %v1031, %v1099
    %v1116 = vadd.f32 %v1032, %v1100
    %v1117 = vadd.f32 %v1033, %v1101
    %v1118 = vadd.f32 %v1034, %v1102
    %v1119 = vadd.f32 %v1035, %v1103
    %v1120 = vadd.f32 %v1036, %v1104
    %v1121 = vadd.f32 %v1037, %v1105
    %v1122 = vadd.f32 %v1038, %v1106
    %v1123 = vadd.f32 %v1039, %v1107
    %v1124 = vld [vmem:[%s153] sm:$0xff]
    %v1125 = vld [vmem:[%s153 + $0x8] sm:$0xff]
    %v1126 = vld [vmem:[%s153 + $0x10] sm:$0xff]
    %v1127 = vld [vmem:[%s153 + $0x18] sm:$0xff]
    %v1128 = vld [vmem:[%s153 + $0x20] sm:$0xff]
    %v1129 = vld [vmem:[%s153 + $0x28] sm:$0xff]
    %v1130 = vld [vmem:[%s153 + $0x30] sm:$0xff]
    %v1131 = vld [vmem:[%s153 + $0x38] sm:$0xff]
    %v1132 = vld [vmem:[%s153 + $0x50] sm:$0xff]
    %v1133 = vld [vmem:[%s153 + $0x58] sm:$0xff]
    %v1134 = vld [vmem:[%s153 + $0x60] sm:$0xff]
    %v1135 = vld [vmem:[%s153 + $0x68] sm:$0xff]
    %v1136 = vld [vmem:[%s153 + $0x70] sm:$0xff]
    %v1137 = vld [vmem:[%s153 + $0x78] sm:$0xff]
    %v1138 = vld [vmem:[%s153 + $0x80] sm:$0xff]
    %v1139 = vld [vmem:[%s153 + $0x88] sm:$0xff]
    %s1140 = scalar_lea.vmem [#allocation6], 10
    %v1141 = vld [vmem:[%s1140] sm:$0x3]
    %1142 = vrot.lane.b32.xlu0 %v1124, 1
    %v1143 = vpop.permute.xlu0 %1142
    %1144 = vrot.lane.b32.xlu0 %v1125, 1
    %v1145 = vpop.permute.xlu0 %1144
    %1146 = vrot.lane.b32.xlu0 %v1126, 1
    %v1147 = vpop.permute.xlu0 %1146
    %1148 = vrot.lane.b32.xlu0 %v1127, 1
    %v1149 = vpop.permute.xlu0 %1148
    %1150 = vrot.lane.b32.xlu0 %v1128, 1
    %v1151 = vpop.permute.xlu0 %1150
    %1152 = vrot.lane.b32.xlu0 %v1129, 1
    %v1153 = vpop.permute.xlu0 %1152
    %1154 = vrot.lane.b32.xlu0 %v1130, 1
    %v1155 = vpop.permute.xlu0 %1154
    %1156 = vrot.lane.b32.xlu0 %v1131, 1
    %v1157 = vpop.permute.xlu0 %1156
    %1158 = vrot.lane.b32.xlu0 %v1132, 1
    %v1159 = vpop.permute.xlu0 %1158
    %1160 = vrot.lane.b32.xlu0 %v1133, 1
    %v1161 = vpop.permute.xlu0 %1160
    %1162 = vrot.lane.b32.xlu0 %v1134, 1
    %v1163 = vpop.permute.xlu0 %1162
    %1164 = vrot.lane.b32.xlu0 %v1135, 1
    %v1165 = vpop.permute.xlu0 %1164
    %1166 = vrot.lane.b32.xlu0 %v1136, 1
    %v1167 = vpop.permute.xlu0 %1166
    %1168 = vrot.lane.b32.xlu0 %v1137, 1
    %v1169 = vpop.permute.xlu0 %1168
    %1170 = vrot.lane.b32.xlu0 %v1138, 1
    %v1171 = vpop.permute.xlu0 %1170
    %1172 = vrot.lane.b32.xlu0 %v1139, 1
    %v1173 = vpop.permute.xlu0 %1172
    %v1174 = vsel %vm208, %v1143, %v1124
    %v1175 = vsel %vm208, %v1145, %v1125
    %v1176 = vsel %vm208, %v1147, %v1126
    %v1177 = vsel %vm208, %v1149, %v1127
    %v1178 = vsel %vm208, %v1151, %v1128
    %v1179 = vsel %vm208, %v1153, %v1129
    %v1180 = vsel %vm208, %v1155, %v1130
    %v1181 = vsel %vm208, %v1157, %v1131
    %v1182 = vsel %vm208, %v1159, %v1132
    %v1183 = vsel %vm208, %v1161, %v1133
    %v1184 = vsel %vm208, %v1163, %v1134
    %v1185 = vsel %vm208, %v1165, %v1135
    %v1186 = vsel %vm208, %v1167, %v1136
    %v1187 = vsel %vm208, %v1169, %v1137
    %v1188 = vsel %vm208, %v1171, %v1138
    %v1189 = vsel %vm208, %v1173, %v1139
    %v1190 = vlaneseq
    %v1191 = vshrl.u32 %v1190, 7
    %v1192 = vsub.s32 0, %v1191
    %v1193 = vrot.slane %v1141, %v1192
    %v1194 = vmul.f32 %v1174, %v1193
    %v1195 = vmul.f32 %v1175, %v1193
    %v1196 = vmul.f32 %v1176, %v1193
    %v1197 = vmul.f32 %v1177, %v1193
    %v1198 = vmul.f32 %v1178, %v1193
    %v1199 = vmul.f32 %v1179, %v1193
    %v1200 = vmul.f32 %v1180, %v1193
    %v1201 = vmul.f32 %v1181, %v1193
    %v1202 = vmul.f32 %v1182, %v1193
    %v1203 = vmul.f32 %v1183, %v1193
    %v1204 = vmul.f32 %v1184, %v1193
    %v1205 = vmul.f32 %v1185, %v1193
    %v1206 = vmul.f32 %v1186, %v1193
    %v1207 = vmul.f32 %v1187, %v1193
    %v1208 = vmul.f32 %v1188, %v1193
    %v1209 = vmul.f32 %v1189, %v1193
    %v1210 = vadd.f32 %v1108, %v1194
    %v1211 = vadd.f32 %v1109, %v1195
    %v1212 = vadd.f32 %v1110, %v1196
    %v1213 = vadd.f32 %v1111, %v1197
    %v1214 = vadd.f32 %v1112, %v1198
    %v1215 = vadd.f32 %v1113, %v1199
    %v1216 = vadd.f32 %v1114, %v1200
    %v1217 = vadd.f32 %v1115, %v1201
    %v1218 = vadd.f32 %v1116, %v1202
    %v1219 = vadd.f32 %v1117, %v1203
    %v1220 = vadd.f32 %v1118, %v1204
    %v1221 = vadd.f32 %v1119, %v1205
    %v1222 = vadd.f32 %v1120, %v1206
    %v1223 = vadd.f32 %v1121, %v1207
    %v1224 = vadd.f32 %v1122, %v1208
    %v1225 = vadd.f32 %v1123, %v1209
    %1226 = vrot.lane.b32.xlu0 %v1124, 127
    %v1227 = vpop.permute.xlu0 %1226
    %1228 = vrot.lane.b32.xlu0 %v1125, 127
    %v1229 = vpop.permute.xlu0 %1228
    %1230 = vrot.lane.b32.xlu0 %v1126, 127
    %v1231 = vpop.permute.xlu0 %1230
    %1232 = vrot.lane.b32.xlu0 %v1127, 127
    %v1233 = vpop.permute.xlu0 %1232
    %1234 = vrot.lane.b32.xlu0 %v1128, 127
    %v1235 = vpop.permute.xlu0 %1234
    %1236 = vrot.lane.b32.xlu0 %v1129, 127
    %v1237 = vpop.permute.xlu0 %1236
    %1238 = vrot.lane.b32.xlu0 %v1130, 127
    %v1239 = vpop.permute.xlu0 %1238
    %1240 = vrot.lane.b32.xlu0 %v1131, 127
    %v1241 = vpop.permute.xlu0 %1240
    %1242 = vrot.lane.b32.xlu0 %v1132, 127
    %v1243 = vpop.permute.xlu0 %1242
    %1244 = vrot.lane.b32.xlu0 %v1133, 127
    %v1245 = vpop.permute.xlu0 %1244
    %1246 = vrot.lane.b32.xlu0 %v1134, 127
    %v1247 = vpop.permute.xlu0 %1246
    %1248 = vrot.lane.b32.xlu0 %v1135, 127
    %v1249 = vpop.permute.xlu0 %1248
    %1250 = vrot.lane.b32.xlu0 %v1136, 127
    %v1251 = vpop.permute.xlu0 %1250
    %1252 = vrot.lane.b32.xlu0 %v1137, 127
    %v1253 = vpop.permute.xlu0 %1252
    %1254 = vrot.lane.b32.xlu0 %v1138, 127
    %v1255 = vpop.permute.xlu0 %1254
    %1256 = vrot.lane.b32.xlu0 %v1139, 127
    %v1257 = vpop.permute.xlu0 %1256
    %v1258 = vsel %vm293, %v1227, %v1124
    %v1259 = vsel %vm293, %v1229, %v1125
    %v1260 = vsel %vm293, %v1231, %v1126
    %v1261 = vsel %vm293, %v1233, %v1127
    %v1262 = vsel %vm293, %v1235, %v1128
    %v1263 = vsel %vm293, %v1237, %v1129
    %v1264 = vsel %vm293, %v1239, %v1130
    %v1265 = vsel %vm293, %v1241, %v1131
    %v1266 = vsel %vm293, %v1243, %v1132
    %v1267 = vsel %vm293, %v1245, %v1133
    %v1268 = vsel %vm293, %v1247, %v1134
    %v1269 = vsel %vm293, %v1249, %v1135
    %v1270 = vsel %vm293, %v1251, %v1136
    %v1271 = vsel %vm293, %v1253, %v1137
    %v1272 = vsel %vm293, %v1255, %v1138
    %v1273 = vsel %vm293, %v1257, %v1139
    %v1274 = vlaneseq
    %v1275 = vshrl.u32 %v1274, 7
    %v1276 = vsub.s32 1, %v1275
    %v1277 = vrot.slane %v1141, %v1276
    %v1278 = vmul.f32 %v1258, %v1277
    %v1279 = vmul.f32 %v1259, %v1277
    %v1280 = vmul.f32 %v1260, %v1277
    %v1281 = vmul.f32 %v1261, %v1277
    %v1282 = vmul.f32 %v1262, %v1277
    %v1283 = vmul.f32 %v1263, %v1277
    %v1284 = vmul.f32 %v1264, %v1277
    %v1285 = vmul.f32 %v1265, %v1277
    %v1286 = vmul.f32 %v1266, %v1277
    %v1287 = vmul.f32 %v1267, %v1277
    %v1288 = vmul.f32 %v1268, %v1277
    %v1289 = vmul.f32 %v1269, %v1277
    %v1290 = vmul.f32 %v1270, %v1277
    %v1291 = vmul.f32 %v1271, %v1277
    %v1292 = vmul.f32 %v1272, %v1277
    %v1293 = vmul.f32 %v1273, %v1277
    %v1294 = vadd.f32 %v1210, %v1278
    %v1295 = vadd.f32 %v1211, %v1279
    %v1296 = vadd.f32 %v1212, %v1280
    %v1297 = vadd.f32 %v1213, %v1281
    %v1298 = vadd.f32 %v1214, %v1282
    %v1299 = vadd.f32 %v1215, %v1283
    %v1300 = vadd.f32 %v1216, %v1284
    %v1301 = vadd.f32 %v1217, %v1285
    %v1302 = vadd.f32 %v1218, %v1286
    %v1303 = vadd.f32 %v1219, %v1287
    %v1304 = vadd.f32 %v1220, %v1288
    %v1305 = vadd.f32 %v1221, %v1289
    %v1306 = vadd.f32 %v1222, %v1290
    %v1307 = vadd.f32 %v1223, %v1291
    %v1308 = vadd.f32 %v1224, %v1292
    %v1309 = vadd.f32 %v1225, %v1293
    %s1310 = scalar_lea.vmem [#allocation2], 16
    %v1311 = vld [vmem:[%s1310] sm:$0xff]
    %v1312 = vld [vmem:[%s1310 + $0x8] sm:$0xff]
    %v1313 = vld [vmem:[%s1310 + $0x10] sm:$0xff]
    %v1314 = vld [vmem:[%s1310 + $0x18] sm:$0xff]
    %v1315 = vld [vmem:[%s1310 + $0x20] sm:$0xff]
    %v1316 = vld [vmem:[%s1310 + $0x28] sm:$0xff]
    %v1317 = vld [vmem:[%s1310 + $0x30] sm:$0xff]
    %v1318 = vld [vmem:[%s1310 + $0x38] sm:$0xff]
    %v1319 = vld [vmem:[%s1310 + $0x50] sm:$0xff]
    %v1320 = vld [vmem:[%s1310 + $0x58] sm:$0xff]
    %v1321 = vld [vmem:[%s1310 + $0x60] sm:$0xff]
    %v1322 = vld [vmem:[%s1310 + $0x68] sm:$0xff]
    %v1323 = vld [vmem:[%s1310 + $0x70] sm:$0xff]
    %v1324 = vld [vmem:[%s1310 + $0x78] sm:$0xff]
    %v1325 = vld [vmem:[%s1310 + $0x80] sm:$0xff]
    %v1326 = vld [vmem:[%s1310 + $0x88] sm:$0xff]
    %s1327 = scalar_lea.vmem [#allocation6], 12
    %v1328 = vld [vmem:[%s1327] sm:$0x3]
    %1329 = vrot.lane.b32.xlu0 %v1311, 1
    %v1330 = vpop.permute.xlu0 %1329
    %1331 = vrot.lane.b32.xlu0 %v1312, 1
    %v1332 = vpop.permute.xlu0 %1331
    %1333 = vrot.lane.b32.xlu0 %v1313, 1
    %v1334 = vpop.permute.xlu0 %1333
    %1335 = vrot.lane.b32.xlu0 %v1314, 1
    %v1336 = vpop.permute.xlu0 %1335
    %1337 = vrot.lane.b32.xlu0 %v1315, 1
    %v1338 = vpop.permute.xlu0 %1337
    %1339 = vrot.lane.b32.xlu0 %v1316, 1
    %v1340 = vpop.permute.xlu0 %1339
    %1341 = vrot.lane.b32.xlu0 %v1317, 1
    %v1342 = vpop.permute.xlu0 %1341
    %1343 = vrot.lane.b32.xlu0 %v1318, 1
    %v1344 = vpop.permute.xlu0 %1343
    %1345 = vrot.lane.b32.xlu0 %v1319, 1
    %v1346 = vpop.permute.xlu0 %1345
    %1347 = vrot.lane.b32.xlu0 %v1320, 1
    %v1348 = vpop.permute.xlu0 %1347
    %1349 = vrot.lane.b32.xlu0 %v1321, 1
    %v1350 = vpop.permute.xlu0 %1349
    %1351 = vrot.lane.b32.xlu0 %v1322, 1
    %v1352 = vpop.permute.xlu0 %1351
    %1353 = vrot.lane.b32.xlu0 %v1323, 1
    %v1354 = vpop.permute.xlu0 %1353
    %1355 = vrot.lane.b32.xlu0 %v1324, 1
    %v1356 = vpop.permute.xlu0 %1355
    %1357 = vrot.lane.b32.xlu0 %v1325, 1
    %v1358 = vpop.permute.xlu0 %1357
    %1359 = vrot.lane.b32.xlu0 %v1326, 1
    %v1360 = vpop.permute.xlu0 %1359
    %v1361 = vsel %vm208, %v1330, %v1311
    %v1362 = vsel %vm208, %v1332, %v1312
    %v1363 = vsel %vm208, %v1334, %v1313
    %v1364 = vsel %vm208, %v1336, %v1314
    %v1365 = vsel %vm208, %v1338, %v1315
    %v1366 = vsel %vm208, %v1340, %v1316
    %v1367 = vsel %vm208, %v1342, %v1317
    %v1368 = vsel %vm208, %v1344, %v1318
    %v1369 = vsel %vm208, %v1346, %v1319
    %v1370 = vsel %vm208, %v1348, %v1320
    %v1371 = vsel %vm208, %v1350, %v1321
    %v1372 = vsel %vm208, %v1352, %v1322
    %v1373 = vsel %vm208, %v1354, %v1323
    %v1374 = vsel %vm208, %v1356, %v1324
    %v1375 = vsel %vm208, %v1358, %v1325
    %v1376 = vsel %vm208, %v1360, %v1326
    %v1377 = vlaneseq
    %v1378 = vshrl.u32 %v1377, 7
    %v1379 = vsub.s32 0, %v1378
    %v1380 = vrot.slane %v1328, %v1379
    %v1381 = vmul.f32 %v1361, %v1380
    %v1382 = vmul.f32 %v1362, %v1380
    %v1383 = vmul.f32 %v1363, %v1380
    %v1384 = vmul.f32 %v1364, %v1380
    %v1385 = vmul.f32 %v1365, %v1380
    %v1386 = vmul.f32 %v1366, %v1380
    %v1387 = vmul.f32 %v1367, %v1380
    %v1388 = vmul.f32 %v1368, %v1380
    %v1389 = vmul.f32 %v1369, %v1380
    %v1390 = vmul.f32 %v1370, %v1380
    %v1391 = vmul.f32 %v1371, %v1380
    %v1392 = vmul.f32 %v1372, %v1380
    %v1393 = vmul.f32 %v1373, %v1380
    %v1394 = vmul.f32 %v1374, %v1380
    %v1395 = vmul.f32 %v1375, %v1380
    %v1396 = vmul.f32 %v1376, %v1380
    %v1397 = vadd.f32 %v1294, %v1381
    %v1398 = vadd.f32 %v1295, %v1382
    %v1399 = vadd.f32 %v1296, %v1383
    %v1400 = vadd.f32 %v1297, %v1384
    %v1401 = vadd.f32 %v1298, %v1385
    %v1402 = vadd.f32 %v1299, %v1386
    %v1403 = vadd.f32 %v1300, %v1387
    %v1404 = vadd.f32 %v1301, %v1388
    %v1405 = vadd.f32 %v1302, %v1389
    %v1406 = vadd.f32 %v1303, %v1390
    %v1407 = vadd.f32 %v1304, %v1391
    %v1408 = vadd.f32 %v1305, %v1392
    %v1409 = vadd.f32 %v1306, %v1393
    %v1410 = vadd.f32 %v1307, %v1394
    %v1411 = vadd.f32 %v1308, %v1395
    %v1412 = vadd.f32 %v1309, %v1396
    %1413 = vrot.lane.b32.xlu0 %v1311, 127
    %v1414 = vpop.permute.xlu0 %1413
    %1415 = vrot.lane.b32.xlu0 %v1312, 127
    %v1416 = vpop.permute.xlu0 %1415
    %1417 = vrot.lane.b32.xlu0 %v1313, 127
    %v1418 = vpop.permute.xlu0 %1417
    %1419 = vrot.lane.b32.xlu0 %v1314, 127
    %v1420 = vpop.permute.xlu0 %1419
    %1421 = vrot.lane.b32.xlu0 %v1315, 127
    %v1422 = vpop.permute.xlu0 %1421
    %1423 = vrot.lane.b32.xlu0 %v1316, 127
    %v1424 = vpop.permute.xlu0 %1423
    %1425 = vrot.lane.b32.xlu0 %v1317, 127
    %v1426 = vpop.permute.xlu0 %1425
    %1427 = vrot.lane.b32.xlu0 %v1318, 127
    %v1428 = vpop.permute.xlu0 %1427
    %1429 = vrot.lane.b32.xlu0 %v1319, 127
    %v1430 = vpop.permute.xlu0 %1429
    %1431 = vrot.lane.b32.xlu0 %v1320, 127
    %v1432 = vpop.permute.xlu0 %1431
    %1433 = vrot.lane.b32.xlu0 %v1321, 127
    %v1434 = vpop.permute.xlu0 %1433
    %1435 = vrot.lane.b32.xlu0 %v1322, 127
    %v1436 = vpop.permute.xlu0 %1435
    %1437 = vrot.lane.b32.xlu0 %v1323, 127
    %v1438 = vpop.permute.xlu0 %1437
    %1439 = vrot.lane.b32.xlu0 %v1324, 127
    %v1440 = vpop.permute.xlu0 %1439
    %1441 = vrot.lane.b32.xlu0 %v1325, 127
    %v1442 = vpop.permute.xlu0 %1441
    %1443 = vrot.lane.b32.xlu0 %v1326, 127
    %v1444 = vpop.permute.xlu0 %1443
    %v1445 = vsel %vm293, %v1414, %v1311
    %v1446 = vsel %vm293, %v1416, %v1312
    %v1447 = vsel %vm293, %v1418, %v1313
    %v1448 = vsel %vm293, %v1420, %v1314
    %v1449 = vsel %vm293, %v1422, %v1315
    %v1450 = vsel %vm293, %v1424, %v1316
    %v1451 = vsel %vm293, %v1426, %v1317
    %v1452 = vsel %vm293, %v1428, %v1318
    %v1453 = vsel %vm293, %v1430, %v1319
    %v1454 = vsel %vm293, %v1432, %v1320
    %v1455 = vsel %vm293, %v1434, %v1321
    %v1456 = vsel %vm293, %v1436, %v1322
    %v1457 = vsel %vm293, %v1438, %v1323
    %v1458 = vsel %vm293, %v1440, %v1324
    %v1459 = vsel %vm293, %v1442, %v1325
    %v1460 = vsel %vm293, %v1444, %v1326
    %v1461 = vlaneseq
    %v1462 = vshrl.u32 %v1461, 7
    %v1463 = vsub.s32 1, %v1462
    %v1464 = vrot.slane %v1328, %v1463
    %v1465 = vmul.f32 %v1445, %v1464
    %v1466 = vmul.f32 %v1446, %v1464
    %v1467 = vmul.f32 %v1447, %v1464
    %v1468 = vmul.f32 %v1448, %v1464
    %v1469 = vmul.f32 %v1449, %v1464
    %v1470 = vmul.f32 %v1450, %v1464
    %v1471 = vmul.f32 %v1451, %v1464
    %v1472 = vmul.f32 %v1452, %v1464
    %v1473 = vmul.f32 %v1453, %v1464
    %v1474 = vmul.f32 %v1454, %v1464
    %v1475 = vmul.f32 %v1455, %v1464
    %v1476 = vmul.f32 %v1456, %v1464
    %v1477 = vmul.f32 %v1457, %v1464
    %v1478 = vmul.f32 %v1458, %v1464
    %v1479 = vmul.f32 %v1459, %v1464
    %v1480 = vmul.f32 %v1460, %v1464
    %v1481 = vadd.f32 %v1397, %v1465
    %v1482 = vadd.f32 %v1398, %v1466
    %v1483 = vadd.f32 %v1399, %v1467
    %v1484 = vadd.f32 %v1400, %v1468
    %v1485 = vadd.f32 %v1401, %v1469
    %v1486 = vadd.f32 %v1402, %v1470
    %v1487 = vadd.f32 %v1403, %v1471
    %v1488 = vadd.f32 %v1404, %v1472
    %v1489 = vadd.f32 %v1405, %v1473
    %v1490 = vadd.f32 %v1406, %v1474
    %v1491 = vadd.f32 %v1407, %v1475
    %v1492 = vadd.f32 %v1408, %v1476
    %v1493 = vadd.f32 %v1409, %v1477
    %v1494 = vadd.f32 %v1410, %v1478
    %v1495 = vadd.f32 %v1411, %v1479
    %v1496 = vadd.f32 %v1412, %v1480
    %s1497 = scalar_lea.vmem [#allocation2], 176
    %v1498 = vld [vmem:[%s1497] sm:$0xff]
    %v1499 = vld [vmem:[%s1497 + $0x8] sm:$0xff]
    %v1500 = vld [vmem:[%s1497 + $0x10] sm:$0xff]
    %v1501 = vld [vmem:[%s1497 + $0x18] sm:$0xff]
    %v1502 = vld [vmem:[%s1497 + $0x20] sm:$0xff]
    %v1503 = vld [vmem:[%s1497 + $0x28] sm:$0xff]
    %v1504 = vld [vmem:[%s1497 + $0x30] sm:$0xff]
    %v1505 = vld [vmem:[%s1497 + $0x38] sm:$0xff]
    %v1506 = vld [vmem:[%s1497 + $0x50] sm:$0xff]
    %v1507 = vld [vmem:[%s1497 + $0x58] sm:$0xff]
    %v1508 = vld [vmem:[%s1497 + $0x60] sm:$0xff]
    %v1509 = vld [vmem:[%s1497 + $0x68] sm:$0xff]
    %v1510 = vld [vmem:[%s1497 + $0x70] sm:$0xff]
    %v1511 = vld [vmem:[%s1497 + $0x78] sm:$0xff]
    %v1512 = vld [vmem:[%s1497 + $0x80] sm:$0xff]
    %v1513 = vld [vmem:[%s1497 + $0x88] sm:$0xff]
    %s1514 = scalar_lea.vmem [#allocation6], 14
    %v1515 = vld [vmem:[%s1514] sm:$0x3]
    %1516 = vrot.lane.b32.xlu0 %v1498, 1
    %v1517 = vpop.permute.xlu0 %1516
    %1518 = vrot.lane.b32.xlu0 %v1499, 1
    %v1519 = vpop.permute.xlu0 %1518
    %1520 = vrot.lane.b32.xlu0 %v1500, 1
    %v1521 = vpop.permute.xlu0 %1520
    %1522 = vrot.lane.b32.xlu0 %v1501, 1
    %v1523 = vpop.permute.xlu0 %1522
    %1524 = vrot.lane.b32.xlu0 %v1502, 1
    %v1525 = vpop.permute.xlu0 %1524
    %1526 = vrot.lane.b32.xlu0 %v1503, 1
    %v1527 = vpop.permute.xlu0 %1526
    %1528 = vrot.lane.b32.xlu0 %v1504, 1
    %v1529 = vpop.permute.xlu0 %1528
    %1530 = vrot.lane.b32.xlu0 %v1505, 1
    %v1531 = vpop.permute.xlu0 %1530
    %1532 = vrot.lane.b32.xlu0 %v1506, 1
    %v1533 = vpop.permute.xlu0 %1532
    %1534 = vrot.lane.b32.xlu0 %v1507, 1
    %v1535 = vpop.permute.xlu0 %1534
    %1536 = vrot.lane.b32.xlu0 %v1508, 1
    %v1537 = vpop.permute.xlu0 %1536
    %1538 = vrot.lane.b32.xlu0 %v1509, 1
    %v1539 = vpop.permute.xlu0 %1538
    %1540 = vrot.lane.b32.xlu0 %v1510, 1
    %v1541 = vpop.permute.xlu0 %1540
    %1542 = vrot.lane.b32.xlu0 %v1511, 1
    %v1543 = vpop.permute.xlu0 %1542
    %1544 = vrot.lane.b32.xlu0 %v1512, 1
    %v1545 = vpop.permute.xlu0 %1544
    %1546 = vrot.lane.b32.xlu0 %v1513, 1
    %v1547 = vpop.permute.xlu0 %1546
    %v1548 = vsel %vm208, %v1517, %v1498
    %v1549 = vsel %vm208, %v1519, %v1499
    %v1550 = vsel %vm208, %v1521, %v1500
    %v1551 = vsel %vm208, %v1523, %v1501
    %v1552 = vsel %vm208, %v1525, %v1502
    %v1553 = vsel %vm208, %v1527, %v1503
    %v1554 = vsel %vm208, %v1529, %v1504
    %v1555 = vsel %vm208, %v1531, %v1505
    %v1556 = vsel %vm208, %v1533, %v1506
    %v1557 = vsel %vm208, %v1535, %v1507
    %v1558 = vsel %vm208, %v1537, %v1508
    %v1559 = vsel %vm208, %v1539, %v1509
    %v1560 = vsel %vm208, %v1541, %v1510
    %v1561 = vsel %vm208, %v1543, %v1511
    %v1562 = vsel %vm208, %v1545, %v1512
    %v1563 = vsel %vm208, %v1547, %v1513
    %v1564 = vlaneseq
    %v1565 = vshrl.u32 %v1564, 7
    %v1566 = vsub.s32 0, %v1565
    %v1567 = vrot.slane %v1515, %v1566
    %v1568 = vmul.f32 %v1548, %v1567
    %v1569 = vmul.f32 %v1549, %v1567
    %v1570 = vmul.f32 %v1550, %v1567
    %v1571 = vmul.f32 %v1551, %v1567
    %v1572 = vmul.f32 %v1552, %v1567
    %v1573 = vmul.f32 %v1553, %v1567
    %v1574 = vmul.f32 %v1554, %v1567
    %v1575 = vmul.f32 %v1555, %v1567
    %v1576 = vmul.f32 %v1556, %v1567
    %v1577 = vmul.f32 %v1557, %v1567
    %v1578 = vmul.f32 %v1558, %v1567
    %v1579 = vmul.f32 %v1559, %v1567
    %v1580 = vmul.f32 %v1560, %v1567
    %v1581 = vmul.f32 %v1561, %v1567
    %v1582 = vmul.f32 %v1562, %v1567
    %v1583 = vmul.f32 %v1563, %v1567
    %v1584 = vadd.f32 %v1481, %v1568
    %v1585 = vadd.f32 %v1482, %v1569
    %v1586 = vadd.f32 %v1483, %v1570
    %v1587 = vadd.f32 %v1484, %v1571
    %v1588 = vadd.f32 %v1485, %v1572
    %v1589 = vadd.f32 %v1486, %v1573
    %v1590 = vadd.f32 %v1487, %v1574
    %v1591 = vadd.f32 %v1488, %v1575
    %v1592 = vadd.f32 %v1489, %v1576
    %v1593 = vadd.f32 %v1490, %v1577
    %v1594 = vadd.f32 %v1491, %v1578
    %v1595 = vadd.f32 %v1492, %v1579
    %v1596 = vadd.f32 %v1493, %v1580
    %v1597 = vadd.f32 %v1494, %v1581
    %v1598 = vadd.f32 %v1495, %v1582
    %v1599 = vadd.f32 %v1496, %v1583
    %1600 = vrot.lane.b32.xlu0 %v1498, 127
    %v1601 = vpop.permute.xlu0 %1600
    %1602 = vrot.lane.b32.xlu0 %v1499, 127
    %v1603 = vpop.permute.xlu0 %1602
    %1604 = vrot.lane.b32.xlu0 %v1500, 127
    %v1605 = vpop.permute.xlu0 %1604
    %1606 = vrot.lane.b32.xlu0 %v1501, 127
    %v1607 = vpop.permute.xlu0 %1606
    %1608 = vrot.lane.b32.xlu0 %v1502, 127
    %v1609 = vpop.permute.xlu0 %1608
    %1610 = vrot.lane.b32.xlu0 %v1503, 127
    %v1611 = vpop.permute.xlu0 %1610
    %1612 = vrot.lane.b32.xlu0 %v1504, 127
    %v1613 = vpop.permute.xlu0 %1612
    %1614 = vrot.lane.b32.xlu0 %v1505, 127
    %v1615 = vpop.permute.xlu0 %1614
    %1616 = vrot.lane.b32.xlu0 %v1506, 127
    %v1617 = vpop.permute.xlu0 %1616
    %1618 = vrot.lane.b32.xlu0 %v1507, 127
    %v1619 = vpop.permute.xlu0 %1618
    %1620 = vrot.lane.b32.xlu0 %v1508, 127
    %v1621 = vpop.permute.xlu0 %1620
    %1622 = vrot.lane.b32.xlu0 %v1509, 127
    %v1623 = vpop.permute.xlu0 %1622
    %1624 = vrot.lane.b32.xlu0 %v1510, 127
    %v1625 = vpop.permute.xlu0 %1624
    %1626 = vrot.lane.b32.xlu0 %v1511, 127
    %v1627 = vpop.permute.xlu0 %1626
    %1628 = vrot.lane.b32.xlu0 %v1512, 127
    %v1629 = vpop.permute.xlu0 %1628
    %1630 = vrot.lane.b32.xlu0 %v1513, 127
    %v1631 = vpop.permute.xlu0 %1630
    %v1632 = vsel %vm293, %v1601, %v1498
    %v1633 = vsel %vm293, %v1603, %v1499
    %v1634 = vsel %vm293, %v1605, %v1500
    %v1635 = vsel %vm293, %v1607, %v1501
    %v1636 = vsel %vm293, %v1609, %v1502
    %v1637 = vsel %vm293, %v1611, %v1503
    %v1638 = vsel %vm293, %v1613, %v1504
    %v1639 = vsel %vm293, %v1615, %v1505
    %v1640 = vsel %vm293, %v1617, %v1506
    %v1641 = vsel %vm293, %v1619, %v1507
    %v1642 = vsel %vm293, %v1621, %v1508
    %v1643 = vsel %vm293, %v1623, %v1509
    %v1644 = vsel %vm293, %v1625, %v1510
    %v1645 = vsel %vm293, %v1627, %v1511
    %v1646 = vsel %vm293, %v1629, %v1512
    %v1647 = vsel %vm293, %v1631, %v1513
    %v1648 = vlaneseq
    %v1649 = vshrl.u32 %v1648, 7
    %v1650 = vsub.s32 1, %v1649
    %v1651 = vrot.slane %v1515, %v1650
    %v1652 = vmul.f32 %v1632, %v1651
    %v1653 = vmul.f32 %v1633, %v1651
    %v1654 = vmul.f32 %v1634, %v1651
    %v1655 = vmul.f32 %v1635, %v1651
    %v1656 = vmul.f32 %v1636, %v1651
    %v1657 = vmul.f32 %v1637, %v1651
    %v1658 = vmul.f32 %v1638, %v1651
    %v1659 = vmul.f32 %v1639, %v1651
    %v1660 = vmul.f32 %v1640, %v1651
    %v1661 = vmul.f32 %v1641, %v1651
    %v1662 = vmul.f32 %v1642, %v1651
    %v1663 = vmul.f32 %v1643, %v1651
    %v1664 = vmul.f32 %v1644, %v1651
    %v1665 = vmul.f32 %v1645, %v1651
    %v1666 = vmul.f32 %v1646, %v1651
    %v1667 = vmul.f32 %v1647, %v1651
    %v1668 = vadd.f32 %v1584, %v1652
    %v1669 = vadd.f32 %v1585, %v1653
    %v1670 = vadd.f32 %v1586, %v1654
    %v1671 = vadd.f32 %v1587, %v1655
    %v1672 = vadd.f32 %v1588, %v1656
    %v1673 = vadd.f32 %v1589, %v1657
    %v1674 = vadd.f32 %v1590, %v1658
    %v1675 = vadd.f32 %v1591, %v1659
    %v1676 = vadd.f32 %v1592, %v1660
    %v1677 = vadd.f32 %v1593, %v1661
    %v1678 = vadd.f32 %v1594, %v1662
    %v1679 = vadd.f32 %v1595, %v1663
    %v1680 = vadd.f32 %v1596, %v1664
    %v1681 = vadd.f32 %v1597, %v1665
    %v1682 = vadd.f32 %v1598, %v1666
    %v1683 = vadd.f32 %v1599, %v1667
    %s1684 = scalar_lea.vmem [#allocation2], 336
    %v1685 = vld [vmem:[%s1684] sm:$0xff]
    %v1686 = vld [vmem:[%s1684 + $0x8] sm:$0xff]
    %v1687 = vld [vmem:[%s1684 + $0x10] sm:$0xff]
    %v1688 = vld [vmem:[%s1684 + $0x18] sm:$0xff]
    %v1689 = vld [vmem:[%s1684 + $0x20] sm:$0xff]
    %v1690 = vld [vmem:[%s1684 + $0x28] sm:$0xff]
    %v1691 = vld [vmem:[%s1684 + $0x30] sm:$0xff]
    %v1692 = vld [vmem:[%s1684 + $0x38] sm:$0xff]
    %v1693 = vld [vmem:[%s1684 + $0x50] sm:$0xff]
    %v1694 = vld [vmem:[%s1684 + $0x58] sm:$0xff]
    %v1695 = vld [vmem:[%s1684 + $0x60] sm:$0xff]
    %v1696 = vld [vmem:[%s1684 + $0x68] sm:$0xff]
    %v1697 = vld [vmem:[%s1684 + $0x70] sm:$0xff]
    %v1698 = vld [vmem:[%s1684 + $0x78] sm:$0xff]
    %v1699 = vld [vmem:[%s1684 + $0x80] sm:$0xff]
    %v1700 = vld [vmem:[%s1684 + $0x88] sm:$0xff]
    %s1701 = scalar_lea.vmem [#allocation6], 16
    %v1702 = vld [vmem:[%s1701] sm:$0x3]
    %1703 = vrot.lane.b32.xlu0 %v1685, 1
    %v1704 = vpop.permute.xlu0 %1703
    %1705 = vrot.lane.b32.xlu0 %v1686, 1
    %v1706 = vpop.permute.xlu0 %1705
    %1707 = vrot.lane.b32.xlu0 %v1687, 1
    %v1708 = vpop.permute.xlu0 %1707
    %1709 = vrot.lane.b32.xlu0 %v1688, 1
    %v1710 = vpop.permute.xlu0 %1709
    %1711 = vrot.lane.b32.xlu0 %v1689, 1
    %v1712 = vpop.permute.xlu0 %1711
    %1713 = vrot.lane.b32.xlu0 %v1690, 1
    %v1714 = vpop.permute.xlu0 %1713
    %1715 = vrot.lane.b32.xlu0 %v1691, 1
    %v1716 = vpop.permute.xlu0 %1715
    %1717 = vrot.lane.b32.xlu0 %v1692, 1
    %v1718 = vpop.permute.xlu0 %1717
    %1719 = vrot.lane.b32.xlu0 %v1693, 1
    %v1720 = vpop.permute.xlu0 %1719
    %1721 = vrot.lane.b32.xlu0 %v1694, 1
    %v1722 = vpop.permute.xlu0 %1721
    %1723 = vrot.lane.b32.xlu0 %v1695, 1
    %v1724 = vpop.permute.xlu0 %1723
    %1725 = vrot.lane.b32.xlu0 %v1696, 1
    %v1726 = vpop.permute.xlu0 %1725
    %1727 = vrot.lane.b32.xlu0 %v1697, 1
    %v1728 = vpop.permute.xlu0 %1727
    %1729 = vrot.lane.b32.xlu0 %v1698, 1
    %v1730 = vpop.permute.xlu0 %1729
    %1731 = vrot.lane.b32.xlu0 %v1699, 1
    %v1732 = vpop.permute.xlu0 %1731
    %1733 = vrot.lane.b32.xlu0 %v1700, 1
    %v1734 = vpop.permute.xlu0 %1733
    %v1735 = vsel %vm208, %v1704, %v1685
    %v1736 = vsel %vm208, %v1706, %v1686
    %v1737 = vsel %vm208, %v1708, %v1687
    %v1738 = vsel %vm208, %v1710, %v1688
    %v1739 = vsel %vm208, %v1712, %v1689
    %v1740 = vsel %vm208, %v1714, %v1690
    %v1741 = vsel %vm208, %v1716, %v1691
    %v1742 = vsel %vm208, %v1718, %v1692
    %v1743 = vsel %vm208, %v1720, %v1693
    %v1744 = vsel %vm208, %v1722, %v1694
    %v1745 = vsel %vm208, %v1724, %v1695
    %v1746 = vsel %vm208, %v1726, %v1696
    %v1747 = vsel %vm208, %v1728, %v1697
    %v1748 = vsel %vm208, %v1730, %v1698
    %v1749 = vsel %vm208, %v1732, %v1699
    %v1750 = vsel %vm208, %v1734, %v1700
    %v1751 = vlaneseq
    %v1752 = vshrl.u32 %v1751, 7
    %v1753 = vsub.s32 0, %v1752
    %v1754 = vrot.slane %v1702, %v1753
    %v1755 = vmul.f32 %v1735, %v1754
    %v1756 = vmul.f32 %v1736, %v1754
    %v1757 = vmul.f32 %v1737, %v1754
    %v1758 = vmul.f32 %v1738, %v1754
    %v1759 = vmul.f32 %v1739, %v1754
    %v1760 = vmul.f32 %v1740, %v1754
    %v1761 = vmul.f32 %v1741, %v1754
    %v1762 = vmul.f32 %v1742, %v1754
    %v1763 = vmul.f32 %v1743, %v1754
    %v1764 = vmul.f32 %v1744, %v1754
    %v1765 = vmul.f32 %v1745, %v1754
    %v1766 = vmul.f32 %v1746, %v1754
    %v1767 = vmul.f32 %v1747, %v1754
    %v1768 = vmul.f32 %v1748, %v1754
    %v1769 = vmul.f32 %v1749, %v1754
    %v1770 = vmul.f32 %v1750, %v1754
    %v1771 = vadd.f32 %v1668, %v1755
    %v1772 = vadd.f32 %v1669, %v1756
    %v1773 = vadd.f32 %v1670, %v1757
    %v1774 = vadd.f32 %v1671, %v1758
    %v1775 = vadd.f32 %v1672, %v1759
    %v1776 = vadd.f32 %v1673, %v1760
    %v1777 = vadd.f32 %v1674, %v1761
    %v1778 = vadd.f32 %v1675, %v1762
    %v1779 = vadd.f32 %v1676, %v1763
    %v1780 = vadd.f32 %v1677, %v1764
    %v1781 = vadd.f32 %v1678, %v1765
    %v1782 = vadd.f32 %v1679, %v1766
    %v1783 = vadd.f32 %v1680, %v1767
    %v1784 = vadd.f32 %v1681, %v1768
    %v1785 = vadd.f32 %v1682, %v1769
    %v1786 = vadd.f32 %v1683, %v1770
    %1787 = vrot.lane.b32.xlu0 %v1685, 127
    %v1788 = vpop.permute.xlu0 %1787
    %1789 = vrot.lane.b32.xlu0 %v1686, 127
    %v1790 = vpop.permute.xlu0 %1789
    %1791 = vrot.lane.b32.xlu0 %v1687, 127
    %v1792 = vpop.permute.xlu0 %1791
    %1793 = vrot.lane.b32.xlu0 %v1688, 127
    %v1794 = vpop.permute.xlu0 %1793
    %1795 = vrot.lane.b32.xlu0 %v1689, 127
    %v1796 = vpop.permute.xlu0 %1795
    %1797 = vrot.lane.b32.xlu0 %v1690, 127
    %v1798 = vpop.permute.xlu0 %1797
    %1799 = vrot.lane.b32.xlu0 %v1691, 127
    %v1800 = vpop.permute.xlu0 %1799
    %1801 = vrot.lane.b32.xlu0 %v1692, 127
    %v1802 = vpop.permute.xlu0 %1801
    %1803 = vrot.lane.b32.xlu0 %v1693, 127
    %v1804 = vpop.permute.xlu0 %1803
    %1805 = vrot.lane.b32.xlu0 %v1694, 127
    %v1806 = vpop.permute.xlu0 %1805
    %1807 = vrot.lane.b32.xlu0 %v1695, 127
    %v1808 = vpop.permute.xlu0 %1807
    %1809 = vrot.lane.b32.xlu0 %v1696, 127
    %v1810 = vpop.permute.xlu0 %1809
    %1811 = vrot.lane.b32.xlu0 %v1697, 127
    %v1812 = vpop.permute.xlu0 %1811
    %1813 = vrot.lane.b32.xlu0 %v1698, 127
    %v1814 = vpop.permute.xlu0 %1813
    %1815 = vrot.lane.b32.xlu0 %v1699, 127
    %v1816 = vpop.permute.xlu0 %1815
    %1817 = vrot.lane.b32.xlu0 %v1700, 127
    %v1818 = vpop.permute.xlu0 %1817
    %v1819 = vsel %vm293, %v1788, %v1685
    %v1820 = vsel %vm293, %v1790, %v1686
    %v1821 = vsel %vm293, %v1792, %v1687
    %v1822 = vsel %vm293, %v1794, %v1688
    %v1823 = vsel %vm293, %v1796, %v1689
    %v1824 = vsel %vm293, %v1798, %v1690
    %v1825 = vsel %vm293, %v1800, %v1691
    %v1826 = vsel %vm293, %v1802, %v1692
    %v1827 = vsel %vm293, %v1804, %v1693
    %v1828 = vsel %vm293, %v1806, %v1694
    %v1829 = vsel %vm293, %v1808, %v1695
    %v1830 = vsel %vm293, %v1810, %v1696
    %v1831 = vsel %vm293, %v1812, %v1697
    %v1832 = vsel %vm293, %v1814, %v1698
    %v1833 = vsel %vm293, %v1816, %v1699
    %v1834 = vsel %vm293, %v1818, %v1700
    %v1835 = vlaneseq
    %v1836 = vshrl.u32 %v1835, 7
    %v1837 = vsub.s32 1, %v1836
    %v1838 = vrot.slane %v1702, %v1837
    %v1839 = vmul.f32 %v1819, %v1838
    %v1840 = vmul.f32 %v1820, %v1838
    %v1841 = vmul.f32 %v1821, %v1838
    %v1842 = vmul.f32 %v1822, %v1838
    %v1843 = vmul.f32 %v1823, %v1838
    %v1844 = vmul.f32 %v1824, %v1838
    %v1845 = vmul.f32 %v1825, %v1838
    %v1846 = vmul.f32 %v1826, %v1838
    %v1847 = vmul.f32 %v1827, %v1838
    %v1848 = vmul.f32 %v1828, %v1838
    %v1849 = vmul.f32 %v1829, %v1838
    %v1850 = vmul.f32 %v1830, %v1838
    %v1851 = vmul.f32 %v1831, %v1838
    %v1852 = vmul.f32 %v1832, %v1838
    %v1853 = vmul.f32 %v1833, %v1838
    %v1854 = vmul.f32 %v1834, %v1838
    %v1855 = vadd.f32 %v1771, %v1839
    %v1856 = vadd.f32 %v1772, %v1840
    %v1857 = vadd.f32 %v1773, %v1841
    %v1858 = vadd.f32 %v1774, %v1842
    %v1859 = vadd.f32 %v1775, %v1843
    %v1860 = vadd.f32 %v1776, %v1844
    %v1861 = vadd.f32 %v1777, %v1845
    %v1862 = vadd.f32 %v1778, %v1846
    %v1863 = vadd.f32 %v1779, %v1847
    %v1864 = vadd.f32 %v1780, %v1848
    %v1865 = vadd.f32 %v1781, %v1849
    %v1866 = vadd.f32 %v1782, %v1850
    %v1867 = vadd.f32 %v1783, %v1851
    %v1868 = vadd.f32 %v1784, %v1852
    %v1869 = vadd.f32 %v1785, %v1853
    %v1870 = vadd.f32 %v1786, %v1854
    %1871 = vst [vmem:[#allocation8] sm:$0xff] %v1855
    %1872 = vst [vmem:[#allocation8 + $0x8] sm:$0xff] %v1856
    %1873 = vst [vmem:[#allocation8 + $0x10] sm:$0xff] %v1857
    %1874 = vst [vmem:[#allocation8 + $0x18] sm:$0xff] %v1858
    %1875 = vst [vmem:[#allocation8 + $0x20] sm:$0xff] %v1859
    %1876 = vst [vmem:[#allocation8 + $0x28] sm:$0xff] %v1860
    %1877 = vst [vmem:[#allocation8 + $0x30] sm:$0xff] %v1861
    %1878 = vst [vmem:[#allocation8 + $0x38] sm:$0xff] %v1862
    %1879 = vst [vmem:[#allocation8 + $0x40] sm:$0xff] %v1863
    %1880 = vst [vmem:[#allocation8 + $0x48] sm:$0xff] %v1864
    %1881 = vst [vmem:[#allocation8 + $0x50] sm:$0xff] %v1865
    %1882 = vst [vmem:[#allocation8 + $0x58] sm:$0xff] %v1866
    %1883 = vst [vmem:[#allocation8 + $0x60] sm:$0xff] %v1867
    %1884 = vst [vmem:[#allocation8 + $0x68] sm:$0xff] %v1868
    %1885 = vst [vmem:[#allocation8 + $0x70] sm:$0xff] %v1869
    %1886 = vst [vmem:[#allocation8 + $0x78] sm:$0xff] %v1870
    // Predicated region
    $region22: #{tpu_custom_call.1} parent=1 // pred_check
      _
    $region23: #{tpu_custom_call.1} parent=1 // pred_check_branch
      %1888 = sbr.rel (0) target = $region25
    $region24: #{tpu_custom_call.1} parent=1 // pred_region
      %s1890 = ssub.s32 2048, 2048
      %1891 = vsyncadd [#allocation5], %s1890
      %s1892 = sshll.u32 [#allocation8], 4
      %s1893 = int_to_ptr.vmem [resolvable:$true] %s1892
      %1898 = dma.vmem_to_hbm [thread:$0]  %s1893, 2048, %s3, [#allocation5], 128, 128, 8
    $region25: #{tpu_custom_call.1} parent=1 // pred_fallthru
      _
    // Predicated region
    $region26: #{tpu_custom_call.1} parent=1 // pred_check
      _
    $region27: #{tpu_custom_call.1} parent=1 // pred_check_branch
      %1900 = sbr.rel (0) target = $region29
    $region28: #{tpu_custom_call.1} parent=1 // pred_region
      %1901 = dma.done [#allocation5], 2048
    $region29: #{tpu_custom_call.1} parent=1 // pred_fallthru
      _
    %1902 = vsyncpa [#allocation4], 1
    %1903 = vsyncpa [#allocation7], 1
    %1904 = vsyncpa [#allocation5], 1

</llo_original>
